<compile_context>
chip_gen: v5e
topology: v5e:2x2
jax: 0.10.0
libtpu: 0.0.40
codegen_flags: <defaults>
</compile_context>

<pallas_src>
from functools import partial

import jax
import jax.numpy as jnp
from jax import lax
from jax.experimental import pallas as pl
from jax.experimental.pallas import tpu as pltpu


_VMEM_LIMIT = 48 * 1024 * 1024   # above v5e(16M)/v6e(32M) defaults, within v7x 64M physical


# ----------------------------- tiling helpers -----------------------------

def _pick_tile(dim, cap, mult):
    """Largest multiple of `mult` that divides `dim` and is <= cap (else `dim`)."""
    if dim <= mult:
        return dim
    best = None
    t = mult
    while t <= min(cap, dim):
        if dim % t == 0:
            best = t
        t += mult
    return best if best is not None else dim


def _row_tile(m, cap=128):
    # >=2 row blocks so the "parallel" axis can be split across TensorCores (v7x);
    # cap 128 keeps the FFN working set inside v7x's 64 MiB VMEM.
    cap = max(8, min(cap, m // 2)) if m >= 16 else m
    return _pick_tile(m, cap, 8)


def _lane_tile(n, cap=512):
    return _pick_tile(n, cap, 128)


def _seq_tile(t, cap=128):
    return _pick_tile(t, cap, 8)


# ----------------------------- Pallas kernels -----------------------------

def _layernorm(x, scale, shift, eps):
    mean = jnp.mean(x, axis=-1, keepdims=True)
    var = jnp.mean((x - mean) ** 2, axis=-1, keepdims=True)
    return (x - mean) * lax.rsqrt(var + eps) * scale + shift


def ln_qkv_kernel(x_ref, scale_ref, shift_ref, w_ref, b_ref, o_ref, h_scr, *, eps):
    # LayerNorm + bf16 cast hoisted out of the column-tile axis (computed once at j==0).
    @pl.when(pl.program_id(1) == 0)
    def _():
        x = x_ref[...].astype(jnp.float32)
        h_scr[...] = _layernorm(x, scale_ref[...], shift_ref[...], eps).astype(jnp.bfloat16)

    acc = jnp.dot(h_scr[...], w_ref[...], preferred_element_type=jnp.float32)
    o_ref[...] = (acc + b_ref[...]).astype(o_ref.dtype)


def attention_kernel(q_ref, k_ref, v_ref, cos_q_ref, sin_q_ref, cos_k_ref, sin_k_ref,
                     wo_ref, bo_ref, res_ref, o_ref,
                     q_scr, m_scr, l_scr, ctx_h, ctx_all,
                     *, head_dim, num_heads, q_tile, kv_tile, window, causal):
    qi = pl.program_id(1)
    h = pl.program_id(2)
    kj = pl.program_id(3)
    n_kv = pl.num_programs(3)
    half = head_dim // 2
    scale = 1.0 / float(head_dim) ** 0.5

    def rotate_half(x):
        if head_dim % 128 == 0:
            return pltpu.roll(x, shift=half, axis=-1)   # XLU slot, no VMEM copy
        # TODO(synk): lane-unaligned head_dim (e.g. 16) -> keep the concatenate fallback.
        return jnp.concatenate([x[:, half:], x[:, :half]], axis=-1)

    def rope(x, cos, sin):
        # sin is sign-folded (first half negated), so no extra negation here.
        return x * cos + rotate_half(x) * sin

    # ---- per (b, qi, h) init: flash state + cached RoPE'd/pre-scaled q ----
    @pl.when(kj == 0)
    def _():
        m_scr[...] = jnp.full_like(m_scr, -1e30)
        l_scr[...] = jnp.zeros_like(l_scr)
        ctx_h[...] = jnp.zeros_like(ctx_h)
        qf = q_ref[0, 0, 0].astype(jnp.float32)
        q_scr[...] = (rope(qf, cos_q_ref[...], sin_q_ref[...]) * scale).astype(jnp.bfloat16)

    # ---- sliding-window band check: skip kv tiles with no allowed columns ----
    q_lo = qi * q_tile - window // 2
    q_hi = qi * q_tile + (q_tile - 1) + (0 if causal else window // 2)
    kv_lo = kj * kv_tile
    kv_hi = kv_lo + (kv_tile - 1)
    in_band = (kv_lo <= q_hi) & (kv_hi >= q_lo)

    @pl.when(in_band)
    def _():
        kf = k_ref[0, 0, 0].astype(jnp.float32)
        kb = rope(kf, cos_k_ref[...], sin_k_ref[...]).astype(jnp.bfloat16)
        s = lax.dot_general(q_scr[...], kb, (((1,), (1,)), ((), ())),
                            preferred_element_type=jnp.float32)

        # in-kernel window/causal mask (replaces the (T,T) f32 mask DMA)
        rows = qi * q_tile + lax.broadcasted_iota(jnp.int32, (q_tile, kv_tile), 0)
        cols = kj * kv_tile + lax.broadcasted_iota(jnp.int32, (q_tile, kv_tile), 1)
        allowed = (cols >= rows - window // 2) & (cols <= rows + window // 2)
        if causal:
            allowed = allowed & (cols <= rows)
        s = jnp.where(allowed, s, -1e30)

        # online softmax (multiplicative mask on p -> fully-masked rows stay zero, no NaN)
        m_new = jnp.maximum(m_scr[...], jnp.max(s, axis=-1, keepdims=True))
        alpha = jnp.exp(m_scr[...] - m_new)
        p = jnp.where(allowed, jnp.exp(s - m_new), 0.0)
        l_scr[...] = alpha * l_scr[...] + jnp.sum(p, axis=-1, keepdims=True)
        ctx_h[...] = alpha * ctx_h[...] + jnp.dot(p.astype(jnp.bfloat16), v_ref[0, 0, 0],
                                                  preferred_element_type=jnp.float32)
        m_scr[...] = m_new

    # ---- end of this head's kv sweep: normalize, write the head's column slab ----
    @pl.when(kj == n_kv - 1)
    def _():
        ctx = ctx_h[...] / l_scr[...]            # exact division (no approx reciprocal)
        # static unroll over heads -> static lane offsets (plain vector stores)
        for hh in range(num_heads):
            @pl.when(h == hh)
            def _(ctx=ctx, hh=hh):
                ctx_all[:, hh * head_dim:(hh + 1) * head_dim] = ctx

    # ---- all heads done: single K=D out-projection + bias + residual ----
    @pl.when((kj == n_kv - 1) & (h == pl.num_programs(2) - 1))
    def _():
        out = jnp.dot(ctx_all[...].astype(jnp.bfloat16), wo_ref[...],
                      preferred_element_type=jnp.float32)
        # dropout p=0 -> identity; residual fused here
        o_ref[0] = (out + bo_ref[...] + res_ref[0]).astype(o_ref.dtype)


def ln_ffn_kernel(x_ref, scale_ref, shift_ref, w1_ref, b1_ref, w2_ref, b2_ref,
                  o_ref, acc_ref, h_scr, *, eps):
    j = pl.program_id(1)

    @pl.when(j == 0)
    def _():
        acc_ref[...] = jnp.zeros_like(acc_ref)
        x = x_ref[...].astype(jnp.float32)
        # LayerNorm + bf16 cast hoisted out of the hidden-tile axis
        h_scr[...] = _layernorm(x, scale_ref[...], shift_ref[...], eps).astype(jnp.bfloat16)

    hid = jnp.dot(h_scr[...], w1_ref[...], preferred_element_type=jnp.float32) + b1_ref[...]
    hid = jax.nn.gelu(hid, approximate=True)
    acc_ref[...] += jnp.dot(hid.astype(jnp.bfloat16), w2_ref[...],
                            preferred_element_type=jnp.float32)

    @pl.when(j == pl.num_programs(1) - 1)
    def _():
        # fused second-linear bias + residual add (dropout p=0 -> identity)
        o_ref[...] = (acc_ref[...] + b2_ref[...] + x_ref[...].astype(jnp.float32)).astype(o_ref.dtype)


# ----------------------------- pallas_call wrappers -----------------------------

def _weight_spec(block_shape, index_map, n_steps):
    # Buffered(3) only when the weight axis actually has >=3 pipeline steps (v5e/v6e win;
    # keeps VMEM small otherwise / on v7x).
    if n_steps >= 3:
        return pl.BlockSpec(block_shape, index_map, pipeline_mode=pl.Buffered(3))
    return pl.BlockSpec(block_shape, index_map)


def ln_qkv(x, scale, shift, w, b, *, eps=1e-5):
    M, D = x.shape
    N = w.shape[1]
    tm, tn = _row_tile(M), _lane_tile(N)
    nj = N // tn
    cost = pl.CostEstimate(flops=int(2 * M * D * N), transcendentals=int(M),
                           bytes_accessed=int(M * D * 4 + D * N * 2 + M * N * 2))
    return pl.pallas_call(
        partial(ln_qkv_kernel, eps=eps),
        out_shape=jax.ShapeDtypeStruct((M, N), jnp.bfloat16),
        grid=(M // tm, nj),
        in_specs=[pl.BlockSpec((tm, D), lambda i, j: (i, 0)),
                  pl.BlockSpec((1, D), lambda i, j: (0, 0)),
                  pl.BlockSpec((1, D), lambda i, j: (0, 0)),
                  _weight_spec((D, tn), lambda i, j: (0, j), nj),
                  pl.BlockSpec((1, tn), lambda i, j: (0, j))],
        out_specs=pl.BlockSpec((tm, tn), lambda i, j: (i, j)),
        scratch_shapes=[pltpu.VMEM((tm, D), jnp.bfloat16)],       # cached LN(x) in bf16
        compiler_params=pltpu.CompilerParams(
            dimension_semantics=("parallel", "arbitrary"),        # j sequential: LN reuse
            vmem_limit_bytes=_VMEM_LIMIT),
        cost_estimate=cost,
    )(x, scale, shift, w, b)


def attention(qkv5, cos, sin_signed, wo, bo, resid, *, window, causal):
    _, B, H, T, Dh = qkv5.shape
    D = wo.shape[1]
    tq = _seq_tile(T)
    tk = _seq_tile(T)
    nq, nk = T // tq, T // tk
    w_eff = min(T, window + 1)
    cost = pl.CostEstimate(
        flops=int(B * H * 4 * T * w_eff * Dh + B * 2 * T * D * D),
        transcendentals=int(B * H * T * w_eff),
        bytes_accessed=int(3 * B * T * D * 2 + 2 * B * T * D * 4 + D * D * 2 + 4 * T * Dh * 4))
    kern = partial(attention_kernel, head_dim=Dh, num_heads=H, q_tile=tq, kv_tile=tk,
                   window=window, causal=causal)
    # TODO(synk): for very large D, N-tile wo instead of keeping the full (D, D) slab resident,
    # and consider a bf16 residual stream to halve the (B,T,D) writeback traffic.
    return pl.pallas_call(
        kern,
        out_shape=jax.ShapeDtypeStruct((B, T, D), jnp.float32),
        grid=(B, nq, H, nk),
        in_specs=[
            pl.BlockSpec((1, 1, 1, tq, Dh), lambda b, qi, h, kj: (0, b, h, qi, 0)),  # q
            pl.BlockSpec((1, 1, 1, tk, Dh), lambda b, qi, h, kj: (1, b, h, kj, 0)),  # k
            pl.BlockSpec((1, 1, 1, tk, Dh), lambda b, qi, h, kj: (2, b, h, kj, 0)),  # v
            pl.BlockSpec((tq, Dh), lambda b, qi, h, kj: (qi, 0)),                    # cos (q rows)
            pl.BlockSpec((tq, Dh), lambda b, qi, h, kj: (qi, 0)),                    # sin (q rows)
            pl.BlockSpec((tk, Dh), lambda b, qi, h, kj: (kj, 0)),                    # cos (k rows)
            pl.BlockSpec((tk, Dh), lambda b, qi, h, kj: (kj, 0)),                    # sin (k rows)
            pl.BlockSpec((D, D), lambda b, qi, h, kj: (0, 0)),                       # wo (resident)
            pl.BlockSpec((1, D), lambda b, qi, h, kj: (0, 0)),                       # bo
            pl.BlockSpec((1, tq, D), lambda b, qi, h, kj: (b, qi, 0)),               # residual
        ],
        out_specs=pl.BlockSpec((1, tq, D), lambda b, qi, h, kj: (b, qi, 0)),
        scratch_shapes=[
            pltpu.VMEM((tq, Dh), jnp.bfloat16),   # RoPE'd + pre-scaled q (hoisted over kv)
            pltpu.VMEM((tq, 1), jnp.float32),     # running max
            pltpu.VMEM((tq, 1), jnp.float32),     # running denom
            pltpu.VMEM((tq, Dh), jnp.float32),    # per-head ctx accumulator
            pltpu.VMEM((tq, D), jnp.float32),     # all-head ctx slab (K=D out-proj input)
        ],
        compiler_params=pltpu.CompilerParams(
            dimension_semantics=("parallel", "parallel", "arbitrary", "arbitrary"),
            vmem_limit_bytes=_VMEM_LIMIT),
        cost_estimate=cost,
    )(qkv5, qkv5, qkv5, cos, sin_signed, cos, sin_signed, wo, bo, resid)


def ln_ffn(x, scale, shift, w1, b1, w2, b2, *, eps=1e-5):
    M, D = x.shape
    DH = w1.shape[1]
    tm, th = _row_tile(M), _lane_tile(DH)
    nj = DH // th
    cost = pl.CostEstimate(flops=int(4 * M * D * DH), transcendentals=int(M * DH),
                           bytes_accessed=int(2 * M * D * 4 + 4 * D * DH))
    return pl.pallas_call(
        partial(ln_ffn_kernel, eps=eps),
        out_shape=jax.ShapeDtypeStruct((M, D), jnp.float32),
        grid=(M // tm, nj),
        in_specs=[pl.BlockSpec((tm, D), lambda i, j: (i, 0)),
                  pl.BlockSpec((1, D), lambda i, j: (0, 0)),
                  pl.BlockSpec((1, D), lambda i, j: (0, 0)),
                  _weight_spec((D, th), lambda i, j: (0, j), nj),
                  pl.BlockSpec((1, th), lambda i, j: (0, j)),
                  _weight_spec((th, D), lambda i, j: (j, 0), nj),
                  pl.BlockSpec((1, D), lambda i, j: (0, 0))],
        out_specs=pl.BlockSpec((tm, D), lambda i, j: (i, 0)),
        scratch_shapes=[pltpu.VMEM((tm, D), jnp.float32),        # out-acc over hidden tiles
                        pltpu.VMEM((tm, D), jnp.bfloat16)],      # cached LN(x) in bf16
        compiler_params=pltpu.CompilerParams(
            dimension_semantics=("parallel", "arbitrary"),
            vmem_limit_bytes=_VMEM_LIMIT),
        cost_estimate=cost,
    )(x, scale, shift, w1, b1, w2, b2)


# ----------------------------- tables, params, block -----------------------------

def rope_tables(T, Dh, base):
    half = Dh // 2
    inv_freq = 1.0 / (base ** (jnp.arange(half, dtype=jnp.float32) / half))
    angles = jnp.arange(T, dtype=jnp.float32)[:, None] * inv_freq[None, :]     # (T, Dh/2)
    cos = jnp.concatenate([jnp.cos(angles), jnp.cos(angles)], axis=-1)         # (T, Dh)
    # sign-folded sin so rope(x) = x*cos + rotate_half(x) * sin_signed
    sin_signed = jnp.concatenate([-jnp.sin(angles), jnp.sin(angles)], axis=-1)
    return cos, sin_signed
    # TODO(synk): original_maximum_sequence_length-based RoPE rescaling not specified
    # in the reference source; plain RoPE is used.


def init_params(key, D, hidden_mult=4):
    ks = jax.random.split(key, 6)
    w = lambda k, shape: jax.random.normal(k, shape, jnp.float32) * 0.02
    return {
        'ln1_scale': jnp.ones((1, D), jnp.float32),
        'ln1_shift': jnp.zeros((1, D), jnp.float32),
        'ln2_scale': jnp.ones((1, D), jnp.float32),
        'ln2_shift': jnp.zeros((1, D), jnp.float32),
        'wq': w(ks[0], (D, D)), 'wk': w(ks[1], (D, D)), 'wv': w(ks[2], (D, D)),
        'bq': jnp.zeros((1, D), jnp.float32),   # qkv_bias=False -> zero bias (identical)
        'bk': jnp.zeros((1, D), jnp.float32),
        'bv': jnp.zeros((1, D), jnp.float32),
        'wo': w(ks[3], (D, D)), 'bo': jnp.zeros((1, D), jnp.float32),
        'w1': w(ks[4], (D, hidden_mult * D)),
        'b1': jnp.zeros((1, hidden_mult * D), jnp.float32),
        'w2': w(ks[5], (hidden_mult * D, D)),
        'b2': jnp.zeros((1, D), jnp.float32),
    }


def prepare_params(p):
    """Fuse QKV weights and cast matmul weights to bf16 (f32 MXU accumulation)."""
    q = dict(p)
    q['wqkv'] = jnp.concatenate([p['wq'], p['wk'], p['wv']], axis=1).astype(jnp.bfloat16)
    q['bqkv'] = jnp.concatenate([p['bq'], p['bk'], p['bv']], axis=1)
    q['wo'] = p['wo'].astype(jnp.bfloat16)
    q['w1'] = p['w1'].astype(jnp.bfloat16)
    q['w2'] = p['w2'].astype(jnp.bfloat16)
    return q


def transformer_block(x, params, cfg):
    B, T, D = x.shape
    H = cfg['number_of_attention_heads']
    Dh = D // H

    x2d = x.reshape(B * T, D)

    # ---- attention sublayer: fused LN1 + QKV projection (one HBM pass over x) ----
    qkv = ln_qkv(x2d, params['ln1_scale'], params['ln1_shift'],
                 params['wqkv'], params['bqkv'])                      # (B*T, 3D) bf16

    # Head split relayout (one XLA pass over the bf16 qkv tensor).
    # TODO(synk): when Dh % 128 == 0 this transpose can be removed by indexing each head's
    # lane slab of the fused (B*T, 3D) tensor directly in the attention BlockSpecs; at the
    # test head_dim (16) such blocks violate the (8,128) BlockSpec constraint.
    qkv5 = qkv.reshape(B, T, 3, H, Dh).transpose(2, 0, 3, 1, 4)       # (3, B, H, T, Dh)

    cos, sin_signed = rope_tables(T, Dh, cfg['rope_theta_base_variation_frequency'])

    # flash-style RoPE + windowed-causal attention + out-projection + residual, one kernel
    x_attn = attention(qkv5, cos, sin_signed, params['wo'], params['bo'], x,
                       window=cfg['sliding_attention_window_size'],
                       causal=cfg['causality'])                       # (B, T, D) f32

    # ---- feed-forward sublayer: fused LN2 + FFN + residual ----
    out = ln_ffn(x_attn.reshape(B * T, D),
                 params['ln2_scale'], params['ln2_shift'],
                 params['w1'], params['b1'], params['w2'], params['b2'])
    return out.reshape(B, T, D)


# ----------------------------- main -----------------------------

if __name__ == "__main__":
    cfg = {
        'input_dimension': 32,
        'context_length': 8,
        'number_of_attention_heads': 2,
        'dropout': 0.0,
        'causality': True,
        'sliding_attention_window_size': 4,
        'rotary_embedding_window_chunk_size': 4,
        'original_maximum_sequence_length': 8,
        'rope_theta_base_variation_frequency': 10000.0,
        'qkv_bias': False,
    }

    key = jax.random.PRNGKey(0)
    kx, kp = jax.random.split(key)
    B, T, D = 2, cfg['context_length'], cfg['input_dimension']
    x = jax.random.normal(kx, (B, T, D), jnp.float32)
    params = prepare_params(init_params(kp, D))

    fwd = jax.jit(partial(transformer_block, cfg=cfg))
    out = jax.block_until_ready(fwd(x, params))
    assert out.shape == (B, T, D)
    assert bool(jnp.all(jnp.isfinite(out)))
    print("KERNEL_OK")
</pallas_src>

<mosaic_0001>
module attributes {stable_mosaic.version = 11 : i64} {
  func.func @ln_qkv_kernel(%arg0: i32, %arg1: i32, %arg2: memref<8x32xf32, #tpu.memory_space<vmem>>, %arg3: memref<1x32xf32, #tpu.memory_space<vmem>>, %arg4: memref<1x32xf32, #tpu.memory_space<vmem>>, %arg5: memref<32x96xbf16, #tpu.memory_space<vmem>>, %arg6: memref<1x96xf32, #tpu.memory_space<vmem>>, %arg7: memref<8x96xbf16, #tpu.memory_space<vmem>>, %arg8: memref<8x32xbf16, #tpu.memory_space<vmem>>) attributes {dimension_semantics = [#tpu.dimension_semantics<parallel>, #tpu.dimension_semantics<arbitrary>], iteration_bounds = array<i64: 2, 1>, scalar_prefetch = 0 : i64, scratch_operands = 1 : i64, tpu.core_type = #tpu.core_type<tc>, window_params = [{transform_indices = @transform_0, window_bounds = array<i64: 8, 32>}, {pipeline_mode = #tpu.pipeline_mode<synchronous>, transform_indices = @transform_1, window_bounds = array<i64: 1, 32>}, {pipeline_mode = #tpu.pipeline_mode<synchronous>, transform_indices = @transform_2, window_bounds = array<i64: 1, 32>}, {transform_indices = @transform_3, window_bounds = array<i64: 32, 96>}, {transform_indices = @transform_4, window_bounds = array<i64: 1, 96>}, {transform_indices = @transform_5, window_bounds = array<i64: 8, 96>}]} {
    %c0_i32 = arith.constant 0 : i32
    %0 = arith.cmpi eq, %arg1, %c0_i32 : i32
    %1 = arith.extui %0 : i1 to i32
    %c0_i32_0 = arith.constant 0 : i32
    %2 = arith.cmpi ne, %1, %c0_i32_0 : i32
    scf.if %2 {
      %c0_8 = arith.constant 0 : index
      %c0_9 = arith.constant 0 : index
      %11 = vector.load %arg2[%c0_8, %c0_9] : memref<8x32xf32, #tpu.memory_space<vmem>>, vector<8x32xf32>
      %c0_10 = arith.constant 0 : index
      %c0_11 = arith.constant 0 : index
      %12 = vector.load %arg3[%c0_10, %c0_11] : memref<1x32xf32, #tpu.memory_space<vmem>>, vector<1x32xf32>
      %c0_12 = arith.constant 0 : index
      %c0_13 = arith.constant 0 : index
      %13 = vector.load %arg4[%c0_12, %c0_13] : memref<1x32xf32, #tpu.memory_space<vmem>>, vector<1x32xf32>
      %cst_14 = arith.constant dense<0.000000e+00> : vector<8xf32>
      %14 = vector.multi_reduction <add>, %11, %cst_14 [1] : vector<8x32xf32> to vector<8xf32>
      %15 = vector.shape_cast %14 : vector<8xf32> to vector<8x1xf32>
      %cst_15 = arith.constant 3.200000e+01 : f32
      %16 = vector.broadcast %cst_15 : f32 to vector<8x1xf32>
      %17 = arith.divf %15, %16 : vector<8x1xf32>
      %18 = vector.broadcast %17 : vector<8x1xf32> to vector<8x32xf32>
      %19 = arith.subf %11, %18 : vector<8x32xf32>
      %20 = arith.mulf %19, %19 : vector<8x32xf32>
      %cst_16 = arith.constant dense<0.000000e+00> : vector<8xf32>
      %21 = vector.multi_reduction <add>, %20, %cst_16 [1] : vector<8x32xf32> to vector<8xf32>
      %22 = vector.shape_cast %21 : vector<8xf32> to vector<8x1xf32>
      %cst_17 = arith.constant 3.200000e+01 : f32
      %23 = vector.broadcast %cst_17 : f32 to vector<8x1xf32>
      %24 = arith.divf %22, %23 : vector<8x1xf32>
      %25 = vector.broadcast %17 : vector<8x1xf32> to vector<8x32xf32>
      %26 = arith.subf %11, %25 : vector<8x32xf32>
      %cst_18 = arith.constant 9.99999974E-6 : f32
      %27 = vector.broadcast %cst_18 : f32 to vector<8x1xf32>
      %28 = arith.addf %24, %27 : vector<8x1xf32>
      %29 = math.rsqrt %28 : vector<8x1xf32>
      %30 = vector.broadcast %29 : vector<8x1xf32> to vector<8x32xf32>
      %31 = arith.mulf %26, %30 : vector<8x32xf32>
      %32 = vector.broadcast %12 : vector<1x32xf32> to vector<8x32xf32>
      %33 = arith.mulf %31, %32 : vector<8x32xf32>
      %34 = vector.broadcast %13 : vector<1x32xf32> to vector<8x32xf32>
      %35 = arith.addf %33, %34 : vector<8x32xf32>
      %36 = arith.truncf %35 : vector<8x32xf32> to vector<8x32xbf16>
      %c0_19 = arith.constant 0 : index
      %c0_20 = arith.constant 0 : index
      %37 = vector.load %arg8[%c0_19, %c0_20] : memref<8x32xbf16, #tpu.memory_space<vmem>>, vector<8x32xbf16>
      tpu.vector_store %arg8[%c0_19, %c0_20], %36 {strides = array<i32>} : memref<8x32xbf16, #tpu.memory_space<vmem>>, vector<8x32xbf16>,
    } else {
    }
    %c0 = arith.constant 0 : index
    %c0_1 = arith.constant 0 : index
    %3 = vector.load %arg8[%c0, %c0_1] : memref<8x32xbf16, #tpu.memory_space<vmem>>, vector<8x32xbf16>
    %c0_2 = arith.constant 0 : index
    %c0_3 = arith.constant 0 : index
    %4 = vector.load %arg5[%c0_2, %c0_3] : memref<32x96xbf16, #tpu.memory_space<vmem>>, vector<32x96xbf16>
    %cst = arith.constant dense<0.000000e+00> : vector<8x96xf32>
    %5 = tpu.matmul %3, %4, %cst {dimension_numbers = #tpu.dot_dimension_numbers<[1], [0], [0], [1], [0, 0, 1, 1], [], []>} : vector<8x32xbf16>, vector<32x96xbf16>, vector<8x96xf32> -> vector<8x96xf32>
    %c0_4 = arith.constant 0 : index
    %c0_5 = arith.constant 0 : index
    %6 = vector.load %arg6[%c0_4, %c0_5] : memref<1x96xf32, #tpu.memory_space<vmem>>, vector<1x96xf32>
    %7 = vector.broadcast %6 : vector<1x96xf32> to vector<8x96xf32>
    %8 = arith.addf %5, %7 : vector<8x96xf32>
    %9 = arith.truncf %8 : vector<8x96xf32> to vector<8x96xbf16>
    %c0_6 = arith.constant 0 : index
    %c0_7 = arith.constant 0 : index
    %10 = vector.load %arg7[%c0_6, %c0_7] : memref<8x96xbf16, #tpu.memory_space<vmem>>, vector<8x96xbf16>
    tpu.vector_store %arg7[%c0_6, %c0_7], %9 {strides = array<i32>} : memref<8x96xbf16, #tpu.memory_space<vmem>>, vector<8x96xbf16>,
    return
  }
  func.func @transform_0(%arg0: i32, %arg1: i32) -> (i32, i32) {
    %c0_i32 = arith.constant 0 : i32
    %c0_i32_0 = arith.constant 0 : i32
    return %arg0, %c0_i32 : i32, i32
  }
  func.func @transform_1(%arg0: i32, %arg1: i32) -> (i32, i32) {
    %c0_i32 = arith.constant 0 : i32
    %c0_i32_0 = arith.constant 0 : i32
    %c0_i32_1 = arith.constant 0 : i32
    return %c0_i32, %c0_i32_0 : i32, i32
  }
  func.func @transform_2(%arg0: i32, %arg1: i32) -> (i32, i32) {
    %c0_i32 = arith.constant 0 : i32
    %c0_i32_0 = arith.constant 0 : i32
    %c0_i32_1 = arith.constant 0 : i32
    return %c0_i32, %c0_i32_0 : i32, i32
  }
  func.func @transform_3(%arg0: i32, %arg1: i32) -> (i32, i32) {
    %c0_i32 = arith.constant 0 : i32
    %c0_i32_0 = arith.constant 0 : i32
    return %c0_i32, %arg1 : i32, i32
  }
  func.func @transform_4(%arg0: i32, %arg1: i32) -> (i32, i32) {
    %c0_i32 = arith.constant 0 : i32
    %c0_i32_0 = arith.constant 0 : i32
    return %c0_i32, %arg1 : i32, i32
  }
  func.func @transform_5(%arg0: i32, %arg1: i32) -> (i32, i32) {
    %c0_i32 = arith.constant 0 : i32
    return %arg0, %arg1 : i32, i32
  }
}

module attributes {stable_mosaic.version = 11 : i64} {
  func.func @attention_kernel(%arg0: i32, %arg1: i32, %arg2: i32, %arg3: i32, %arg4: memref<1x1x1x8x16xbf16, #tpu.memory_space<vmem>>, %arg5: memref<1x1x1x8x16xbf16, #tpu.memory_space<vmem>>, %arg6: memref<1x1x1x8x16xbf16, #tpu.memory_space<vmem>>, %arg7: memref<8x16xf32, #tpu.memory_space<vmem>>, %arg8: memref<8x16xf32, #tpu.memory_space<vmem>>, %arg9: memref<8x16xf32, #tpu.memory_space<vmem>>, %arg10: memref<8x16xf32, #tpu.memory_space<vmem>>, %arg11: memref<32x32xbf16, #tpu.memory_space<vmem>>, %arg12: memref<1x32xf32, #tpu.memory_space<vmem>>, %arg13: memref<1x8x32xf32, #tpu.memory_space<vmem>>, %arg14: memref<1x8x32xf32, #tpu.memory_space<vmem>>, %arg15: memref<8x16xbf16, #tpu.memory_space<vmem>>, %arg16: memref<8x1xf32, #tpu.memory_space<vmem>>, %arg17: memref<8x1xf32, #tpu.memory_space<vmem>>, %arg18: memref<8x16xf32, #tpu.memory_space<vmem>>, %arg19: memref<8x32xf32, #tpu.memory_space<vmem>>) attributes {dimension_semantics = [#tpu.dimension_semantics<parallel>, #tpu.dimension_semantics<parallel>, #tpu.dimension_semantics<arbitrary>, #tpu.dimension_semantics<arbitrary>], iteration_bounds = array<i64: 2, 1, 2, 1>, scalar_prefetch = 0 : i64, scratch_operands = 5 : i64, tpu.core_type = #tpu.core_type<tc>, window_params = [{transform_indices = @transform_0, window_bounds = array<i64: 1, 1, 1, 8, 16>}, {transform_indices = @transform_1, window_bounds = array<i64: 1, 1, 1, 8, 16>}, {transform_indices = @transform_2, window_bounds = array<i64: 1, 1, 1, 8, 16>}, {transform_indices = @transform_3, window_bounds = array<i64: 8, 16>}, {transform_indices = @transform_4, window_bounds = array<i64: 8, 16>}, {transform_indices = @transform_5, window_bounds = array<i64: 8, 16>}, {transform_indices = @transform_6, window_bounds = array<i64: 8, 16>}, {pipeline_mode = #tpu.pipeline_mode<synchronous>, transform_indices = @transform_7, window_bounds = array<i64: 32, 32>}, {pipeline_mode = #tpu.pipeline_mode<synchronous>, transform_indices = @transform_8, window_bounds = array<i64: 1, 32>}, {transform_indices = @transform_9, window_bounds = array<i64: 1, 8, 32>}, {transform_indices = @transform_10, window_bounds = array<i64: 1, 8, 32>}]} {
    %c0_i32 = arith.constant 0 : i32
    %0 = arith.cmpi eq, %arg3, %c0_i32 : i32
    %1 = arith.extui %0 : i1 to i32
    %c0_i32_0 = arith.constant 0 : i32
    %2 = arith.cmpi ne, %1, %c0_i32_0 : i32
    scf.if %2 {
      %cst = arith.constant -1.000000e+30 : f32
      %23 = vector.broadcast %cst : f32 to vector<8x1xf32>
      %c0 = arith.constant 0 : index
      %c0_10 = arith.constant 0 : index
      %24 = vector.load %arg16[%c0, %c0_10] : memref<8x1xf32, #tpu.memory_space<vmem>>, vector<8x1xf32>
      tpu.vector_store %arg16[%c0, %c0_10], %23 {strides = array<i32>} : memref<8x1xf32, #tpu.memory_space<vmem>>, vector<8x1xf32>,
      %cst_11 = arith.constant 0.000000e+00 : f32
      %25 = vector.broadcast %cst_11 : f32 to vector<8x1xf32>
      %c0_12 = arith.constant 0 : index
      %c0_13 = arith.constant 0 : index
      %26 = vector.load %arg17[%c0_12, %c0_13] : memref<8x1xf32, #tpu.memory_space<vmem>>, vector<8x1xf32>
      tpu.vector_store %arg17[%c0_12, %c0_13], %25 {strides = array<i32>} : memref<8x1xf32, #tpu.memory_space<vmem>>, vector<8x1xf32>,
      %cst_14 = arith.constant 0.000000e+00 : f32
      %27 = vector.broadcast %cst_14 : f32 to vector<8x16xf32>
      %c0_15 = arith.constant 0 : index
      %c0_16 = arith.constant 0 : index
      %28 = vector.load %arg18[%c0_15, %c0_16] : memref<8x16xf32, #tpu.memory_space<vmem>>, vector<8x16xf32>
      tpu.vector_store %arg18[%c0_15, %c0_16], %27 {strides = array<i32>} : memref<8x16xf32, #tpu.memory_space<vmem>>, vector<8x16xf32>,
      %c0_17 = arith.constant 0 : index
      %c0_18 = arith.constant 0 : index
      %c0_19 = arith.constant 0 : index
      %c0_20 = arith.constant 0 : index
      %c0_21 = arith.constant 0 : index
      %29 = vector.load %arg4[%c0_17, %c0_18, %c0_19, %c0_20, %c0_21] : memref<1x1x1x8x16xbf16, #tpu.memory_space<vmem>>, vector<1x1x1x8x16xbf16>
      %30 = vector.shape_cast %29 : vector<1x1x1x8x16xbf16> to vector<8x16xbf16>
      %31 = arith.extf %30 : vector<8x16xbf16> to vector<8x16xf32>
      %c0_22 = arith.constant 0 : index
      %c0_23 = arith.constant 0 : index
      %32 = vector.load %arg7[%c0_22, %c0_23] : memref<8x16xf32, #tpu.memory_space<vmem>>, vector<8x16xf32>
      %c0_24 = arith.constant 0 : index
      %c0_25 = arith.constant 0 : index
      %33 = vector.load %arg8[%c0_24, %c0_25] : memref<8x16xf32, #tpu.memory_space<vmem>>, vector<8x16xf32>
      %34 = arith.mulf %31, %32 : vector<8x16xf32>
      %35 = vector.extract_strided_slice %31 {offsets = [0, 8], sizes = [8, 8], strides = [1, 1]} : vector<8x16xf32> to vector<8x8xf32>
      %36 = vector.extract_strided_slice %31 {offsets = [0, 0], sizes = [8, 8], strides = [1, 1]} : vector<8x16xf32> to vector<8x8xf32>
      %37 = tpu.concatenate %35, %36 in 1 : vector<8x8xf32>, vector<8x8xf32> -> vector<8x16xf32>
      %38 = arith.mulf %37, %33 : vector<8x16xf32>
      %39 = arith.addf %34, %38 : vector<8x16xf32>
      %cst_26 = arith.constant 2.500000e-01 : f32
      %40 = vector.broadcast %cst_26 : f32 to vector<8x16xf32>
      %41 = arith.mulf %39, %40 : vector<8x16xf32>
      %42 = arith.truncf %41 : vector<8x16xf32> to vector<8x16xbf16>
      %c0_27 = arith.constant 0 : index
      %c0_28 = arith.constant 0 : index
      %43 = vector.load %arg15[%c0_27, %c0_28] : memref<8x16xbf16, #tpu.memory_space<vmem>>, vector<8x16xbf16>
      tpu.vector_store %arg15[%c0_27, %c0_28], %42 {strides = array<i32>} : memref<8x16xbf16, #tpu.memory_space<vmem>>, vector<8x16xbf16>,
    } else {
    }
    %c8_i32 = arith.constant 8 : i32
    %3 = arith.muli %arg1, %c8_i32 : i32
    %c2_i32 = arith.constant 2 : i32
    %4 = arith.subi %3, %c2_i32 : i32
    %c8_i32_1 = arith.constant 8 : i32
    %5 = arith.muli %arg1, %c8_i32_1 : i32
    %c7_i32 = arith.constant 7 : i32
    %6 = arith.addi %5, %c7_i32 : i32
    %c0_i32_2 = arith.constant 0 : i32
    %7 = arith.addi %6, %c0_i32_2 : i32
    %c8_i32_3 = arith.constant 8 : i32
    %8 = arith.muli %arg3, %c8_i32_3 : i32
    %c7_i32_4 = arith.constant 7 : i32
    %9 = arith.addi %8, %c7_i32_4 : i32
    %10 = arith.cmpi sle, %8, %7 : i32
    %11 = arith.cmpi sge, %9, %4 : i32
    %12 = arith.andi %10, %11 : i1
    %13 = arith.extui %12 : i1 to i32
    %c0_i32_5 = arith.constant 0 : i32
    %14 = arith.cmpi ne, %13, %c0_i32_5 : i32
    scf.if %14 {
      %c0 = arith.constant 0 : index
      %c0_10 = arith.constant 0 : index
      %c0_11 = arith.constant 0 : index
      %c0_12 = arith.constant 0 : index
      %c0_13 = arith.constant 0 : index
      %23 = vector.load %arg5[%c0, %c0_10, %c0_11, %c0_12, %c0_13] : memref<1x1x1x8x16xbf16, #tpu.memory_space<vmem>>, vector<1x1x1x8x16xbf16>
      %24 = vector.shape_cast %23 : vector<1x1x1x8x16xbf16> to vector<8x16xbf16>
      %25 = arith.extf %24 : vector<8x16xbf16> to vector<8x16xf32>
      %c0_14 = arith.constant 0 : index
      %c0_15 = arith.constant 0 : index
      %26 = vector.load %arg9[%c0_14, %c0_15] : memref<8x16xf32, #tpu.memory_space<vmem>>, vector<8x16xf32>
      %c0_16 = arith.constant 0 : index
      %c0_17 = arith.constant 0 : index
      %27 = vector.load %arg10[%c0_16, %c0_17] : memref<8x16xf32, #tpu.memory_space<vmem>>, vector<8x16xf32>
      %28 = arith.mulf %25, %26 : vector<8x16xf32>
      %29 = vector.extract_strided_slice %25 {offsets = [0, 8], sizes = [8, 8], strides = [1, 1]} : vector<8x16xf32> to vector<8x8xf32>
      %30 = vector.extract_strided_slice %25 {offsets = [0, 0], sizes = [8, 8], strides = [1, 1]} : vector<8x16xf32> to vector<8x8xf32>
      %31 = tpu.concatenate %29, %30 in 1 : vector<8x8xf32>, vector<8x8xf32> -> vector<8x16xf32>
      %32 = arith.mulf %31, %27 : vector<8x16xf32>
      %33 = arith.addf %28, %32 : vector<8x16xf32>
      %34 = arith.truncf %33 : vector<8x16xf32> to vector<8x16xbf16>
      %c0_18 = arith.constant 0 : index
      %c0_19 = arith.constant 0 : index
      %35 = vector.load %arg15[%c0_18, %c0_19] : memref<8x16xbf16, #tpu.memory_space<vmem>>, vector<8x16xbf16>
      %cst = arith.constant dense<0.000000e+00> : vector<8x8xf32>
      %36 = tpu.matmul %35, %34, %cst {dimension_numbers = #tpu.dot_dimension_numbers<[1], [1], [0], [0], [0, 0, 1, 0], [], []>} : vector<8x16xbf16>, vector<8x16xbf16>, vector<8x8xf32> -> vector<8x8xf32>
      %c8_i32_20 = arith.constant 8 : i32
      %37 = arith.muli %arg1, %c8_i32_20 : i32
      %38 = tpu.iota {dimensions = array<i32: 0>} : vector<8x8xi32>
      %39 = vector.broadcast %37 : i32 to vector<8x8xi32>
      %40 = arith.addi %39, %38 : vector<8x8xi32>
      %c8_i32_21 = arith.constant 8 : i32
      %41 = arith.muli %arg3, %c8_i32_21 : i32
      %42 = tpu.iota {dimensions = array<i32: 1>} : vector<8x8xi32>
      %43 = vector.broadcast %41 : i32 to vector<8x8xi32>
      %44 = arith.addi %43, %42 : vector<8x8xi32>
      %c2_i32_22 = arith.constant 2 : i32
      %45 = vector.broadcast %c2_i32_22 : i32 to vector<8x8xi32>
      %46 = arith.subi %40, %45 : vector<8x8xi32>
      %47 = arith.cmpi sge, %44, %46 : vector<8x8xi32>
      %c2_i32_23 = arith.constant 2 : i32
      %48 = vector.broadcast %c2_i32_23 : i32 to vector<8x8xi32>
      %49 = arith.addi %40, %48 : vector<8x8xi32>
      %50 = arith.cmpi sle, %44, %49 : vector<8x8xi32>
      %51 = arith.andi %47, %50 : vector<8x8xi1>
      %52 = arith.cmpi sle, %44, %40 : vector<8x8xi32>
      %53 = arith.andi %51, %52 : vector<8x8xi1>
      %cst_24 = arith.constant -1.000000e+30 : f32
      %54 = vector.broadcast %cst_24 : f32 to vector<8x8xf32>
      %55 = arith.select %53, %36, %54 : vector<8x8xi1>, vector<8x8xf32>
      %c0_25 = arith.constant 0 : index
      %c0_26 = arith.constant 0 : index
      %56 = vector.load %arg16[%c0_25, %c0_26] : memref<8x1xf32, #tpu.memory_space<vmem>>, vector<8x1xf32>
      %cst_27 = arith.constant dense<0xFF800000> : vector<8xf32>
      %57 = vector.multi_reduction <maximumf>, %55, %cst_27 [1] : vector<8x8xf32> to vector<8xf32>
      %58 = vector.shape_cast %57 : vector<8xf32> to vector<8x1xf32>
      %59 = arith.maximumf %56, %58 : vector<8x1xf32>
      %c0_28 = arith.constant 0 : index
      %c0_29 = arith.constant 0 : index
      %60 = vector.load %arg16[%c0_28, %c0_29] : memref<8x1xf32, #tpu.memory_space<vmem>>, vector<8x1xf32>
      %61 = arith.subf %60, %59 : vector<8x1xf32>
      %62 = math.exp %61 : vector<8x1xf32>
      %63 = vector.broadcast %59 : vector<8x1xf32> to vector<8x8xf32>
      %64 = arith.subf %55, %63 : vector<8x8xf32>
      %65 = math.exp %64 : vector<8x8xf32>
      %cst_30 = arith.constant 0.000000e+00 : f32
      %66 = vector.broadcast %cst_30 : f32 to vector<8x8xf32>
      %67 = arith.select %53, %65, %66 : vector<8x8xi1>, vector<8x8xf32>
      %c0_31 = arith.constant 0 : index
      %c0_32 = arith.constant 0 : index
      %68 = vector.load %arg17[%c0_31, %c0_32] : memref<8x1xf32, #tpu.memory_space<vmem>>, vector<8x1xf32>
      %69 = arith.mulf %62, %68 : vector<8x1xf32>
      %cst_33 = arith.constant dense<0.000000e+00> : vector<8xf32>
      %70 = vector.multi_reduction <add>, %67, %cst_33 [1] : vector<8x8xf32> to vector<8xf32>
      %71 = vector.shape_cast %70 : vector<8xf32> to vector<8x1xf32>
      %72 = arith.addf %69, %71 : vector<8x1xf32>
      %c0_34 = arith.constant 0 : index
      %c0_35 = arith.constant 0 : index
      %73 = vector.load %arg17[%c0_34, %c0_35] : memref<8x1xf32, #tpu.memory_space<vmem>>, vector<8x1xf32>
      tpu.vector_store %arg17[%c0_34, %c0_35], %72 {strides = array<i32>} : memref<8x1xf32, #tpu.memory_space<vmem>>, vector<8x1xf32>,
      %c0_36 = arith.constant 0 : index
      %c0_37 = arith.constant 0 : index
      %74 = vector.load %arg18[%c0_36, %c0_37] : memref<8x16xf32, #tpu.memory_space<vmem>>, vector<8x16xf32>
      %75 = vector.broadcast %62 : vector<8x1xf32> to vector<8x16xf32>
      %76 = arith.mulf %75, %74 : vector<8x16xf32>
      %77 = arith.truncf %67 : vector<8x8xf32> to vector<8x8xbf16>
      %c0_38 = arith.constant 0 : index
      %c0_39 = arith.constant 0 : index
      %c0_40 = arith.constant 0 : index
      %c0_41 = arith.constant 0 : index
      %c0_42 = arith.constant 0 : index
      %78 = vector.load %arg6[%c0_38, %c0_39, %c0_40, %c0_41, %c0_42] : memref<1x1x1x8x16xbf16, #tpu.memory_space<vmem>>, vector<1x1x1x8x16xbf16>
      %79 = vector.shape_cast %78 : vector<1x1x1x8x16xbf16> to vector<8x16xbf16>
      %cst_43 = arith.constant dense<0.000000e+00> : vector<8x16xf32>
      %80 = tpu.matmul %77, %79, %cst_43 {dimension_numbers = #tpu.dot_dimension_numbers<[1], [0], [0], [1], [0, 0, 1, 1], [], []>} : vector<8x8xbf16>, vector<8x16xbf16>, vector<8x16xf32> -> vector<8x16xf32>
      %81 = arith.addf %76, %80 : vector<8x16xf32>
      %c0_44 = arith.constant 0 : index
      %c0_45 = arith.constant 0 : index
      %82 = vector.load %arg18[%c0_44, %c0_45] : memref<8x16xf32, #tpu.memory_space<vmem>>, vector<8x16xf32>
      tpu.vector_store %arg18[%c0_44, %c0_45], %81 {strides = array<i32>} : memref<8x16xf32, #tpu.memory_space<vmem>>, vector<8x16xf32>,
      %c0_46 = arith.constant 0 : index
      %c0_47 = arith.constant 0 : index
      %83 = vector.load %arg16[%c0_46, %c0_47] : memref<8x1xf32, #tpu.memory_space<vmem>>, vector<8x1xf32>
      tpu.vector_store %arg16[%c0_46, %c0_47], %59 {strides = array<i32>} : memref<8x1xf32, #tpu.memory_space<vmem>>, vector<8x1xf32>,
    } else {
    }
    %c0_i32_6 = arith.constant 0 : i32
    %15 = arith.cmpi eq, %arg3, %c0_i32_6 : i32
    %16 = arith.extui %15 : i1 to i32
    %c0_i32_7 = arith.constant 0 : i32
    %17 = arith.cmpi ne, %16, %c0_i32_7 : i32
    scf.if %17 {
      %c0 = arith.constant 0 : index
      %c0_10 = arith.constant 0 : index
      %23 = vector.load %arg18[%c0, %c0_10] : memref<8x16xf32, #tpu.memory_space<vmem>>, vector<8x16xf32>
      %c0_11 = arith.constant 0 : index
      %c0_12 = arith.constant 0 : index
      %24 = vector.load %arg17[%c0_11, %c0_12] : memref<8x1xf32, #tpu.memory_space<vmem>>, vector<8x1xf32>
      %25 = vector.broadcast %24 : vector<8x1xf32> to vector<8x16xf32>
      %26 = arith.divf %23, %25 : vector<8x16xf32>
      %c0_i32_13 = arith.constant 0 : i32
      %27 = arith.cmpi eq, %arg2, %c0_i32_13 : i32
      %28 = arith.extui %27 : i1 to i32
      %c0_i32_14 = arith.constant 0 : i32
      %29 = arith.cmpi ne, %28, %c0_i32_14 : i32
      scf.if %29 {
        %c0_17 = arith.constant 0 : index
        %c0_18 = arith.constant 0 : index
        %33 = vector.load %arg19[%c0_17, %c0_18] : memref<8x32xf32, #tpu.memory_space<vmem>>, vector<8x16xf32>
        tpu.vector_store %arg19[%c0_17, %c0_18], %26 {strides = array<i32>} : memref<8x32xf32, #tpu.memory_space<vmem>>, vector<8x16xf32>,
      } else {
      }
      %c1_i32_15 = arith.constant 1 : i32
      %30 = arith.cmpi eq, %arg2, %c1_i32_15 : i32
      %31 = arith.extui %30 : i1 to i32
      %c0_i32_16 = arith.constant 0 : i32
      %32 = arith.cmpi ne, %31, %c0_i32_16 : i32
      scf.if %32 {
        %c0_17 = arith.constant 0 : index
        %c16 = arith.constant 16 : index
        %33 = vector.load %arg19[%c0_17, %c16] : memref<8x32xf32, #tpu.memory_space<vmem>>, vector<8x16xf32>
        tpu.vector_store %arg19[%c0_17, %c16], %26 {strides = array<i32>} : memref<8x32xf32, #tpu.memory_space<vmem>>, vector<8x16xf32>,
      } else {
      }
    } else {
    }
    %c0_i32_8 = arith.constant 0 : i32
    %18 = arith.cmpi eq, %arg3, %c0_i32_8 : i32
    %c1_i32 = arith.constant 1 : i32
    %19 = arith.cmpi eq, %arg2, %c1_i32 : i32
    %20 = arith.andi %18, %19 : i1
    %21 = arith.extui %20 : i1 to i32
    %c0_i32_9 = arith.constant 0 : i32
    %22 = arith.cmpi ne, %21, %c0_i32_9 : i32
    scf.if %22 {
      %c0 = arith.constant 0 : index
      %c0_10 = arith.constant 0 : index
      %23 = vector.load %arg19[%c0, %c0_10] : memref<8x32xf32, #tpu.memory_space<vmem>>, vector<8x32xf32>
      %24 = arith.truncf %23 : vector<8x32xf32> to vector<8x32xbf16>
      %c0_11 = arith.constant 0 : index
      %c0_12 = arith.constant 0 : index
      %25 = vector.load %arg11[%c0_11, %c0_12] : memref<32x32xbf16, #tpu.memory_space<vmem>>, vector<32x32xbf16>
      %cst = arith.constant dense<0.000000e+00> : vector<8x32xf32>
      %26 = tpu.matmul %24, %25, %cst {dimension_numbers = #tpu.dot_dimension_numbers<[1], [0], [0], [1], [0, 0, 1, 1], [], []>} : vector<8x32xbf16>, vector<32x32xbf16>, vector<8x32xf32> -> vector<8x32xf32>
      %c0_13 = arith.constant 0 : index
      %c0_14 = arith.constant 0 : index
      %27 = vector.load %arg12[%c0_13, %c0_14] : memref<1x32xf32, #tpu.memory_space<vmem>>, vector<1x32xf32>
      %28 = vector.broadcast %27 : vector<1x32xf32> to vector<8x32xf32>
      %29 = arith.addf %26, %28 : vector<8x32xf32>
      %c0_15 = arith.constant 0 : index
      %c0_16 = arith.constant 0 : index
      %c0_17 = arith.constant 0 : index
      %30 = vector.load %arg13[%c0_15, %c0_16, %c0_17] : memref<1x8x32xf32, #tpu.memory_space<vmem>>, vector<1x8x32xf32>
      %31 = vector.shape_cast %30 : vector<1x8x32xf32> to vector<8x32xf32>
      %32 = arith.addf %29, %31 : vector<8x32xf32>
      %c0_18 = arith.constant 0 : index
      %c0_19 = arith.constant 0 : index
      %c0_20 = arith.constant 0 : index
      %33 = vector.load %arg14[%c0_18, %c0_19, %c0_20] : memref<1x8x32xf32, #tpu.memory_space<vmem>>, vector<1x8x32xf32>
      %34 = vector.shape_cast %33 : vector<1x8x32xf32> to vector<8x32xf32>
      %35 = vector.shape_cast %32 : vector<8x32xf32> to vector<1x8x32xf32>
      tpu.vector_store %arg14[%c0_18, %c0_19, %c0_20], %35 {strides = array<i32>} : memref<1x8x32xf32, #tpu.memory_space<vmem>>, vector<1x8x32xf32>,
    } else {
    }
    return
  }
  func.func @transform_0(%arg0: i32, %arg1: i32, %arg2: i32, %arg3: i32) -> (i32, i32, i32, i32, i32) {
    %c0_i32 = arith.constant 0 : i32
    %c0_i32_0 = arith.constant 0 : i32
    %c0_i32_1 = arith.constant 0 : i32
    return %c0_i32, %arg0, %arg2, %arg1, %c0_i32_0 : i32, i32, i32, i32, i32
  }
  func.func @transform_1(%arg0: i32, %arg1: i32, %arg2: i32, %arg3: i32) -> (i32, i32, i32, i32, i32) {
    %c1_i32 = arith.constant 1 : i32
    %c0_i32 = arith.constant 0 : i32
    %c0_i32_0 = arith.constant 0 : i32
    return %c1_i32, %arg0, %arg2, %arg3, %c0_i32 : i32, i32, i32, i32, i32
  }
  func.func @transform_2(%arg0: i32, %arg1: i32, %arg2: i32, %arg3: i32) -> (i32, i32, i32, i32, i32) {
    %c2_i32 = arith.constant 2 : i32
    %c0_i32 = arith.constant 0 : i32
    %c0_i32_0 = arith.constant 0 : i32
    return %c2_i32, %arg0, %arg2, %arg3, %c0_i32 : i32, i32, i32, i32, i32
  }
  func.func @transform_3(%arg0: i32, %arg1: i32, %arg2: i32, %arg3: i32) -> (i32, i32) {
    %c0_i32 = arith.constant 0 : i32
    %c0_i32_0 = arith.constant 0 : i32
    return %arg1, %c0_i32 : i32, i32
  }
  func.func @transform_4(%arg0: i32, %arg1: i32, %arg2: i32, %arg3: i32) -> (i32, i32) {
    %c0_i32 = arith.constant 0 : i32
    %c0_i32_0 = arith.constant 0 : i32
    return %arg1, %c0_i32 : i32, i32
  }
  func.func @transform_5(%arg0: i32, %arg1: i32, %arg2: i32, %arg3: i32) -> (i32, i32) {
    %c0_i32 = arith.constant 0 : i32
    %c0_i32_0 = arith.constant 0 : i32
    return %arg3, %c0_i32 : i32, i32
  }
  func.func @transform_6(%arg0: i32, %arg1: i32, %arg2: i32, %arg3: i32) -> (i32, i32) {
    %c0_i32 = arith.constant 0 : i32
    %c0_i32_0 = arith.constant 0 : i32
    return %arg3, %c0_i32 : i32, i32
  }
  func.func @transform_7(%arg0: i32, %arg1: i32, %arg2: i32, %arg3: i32) -> (i32, i32) {
    %c0_i32 = arith.constant 0 : i32
    %c0_i32_0 = arith.constant 0 : i32
    %c0_i32_1 = arith.constant 0 : i32
    return %c0_i32, %c0_i32_0 : i32, i32
  }
  func.func @transform_8(%arg0: i32, %arg1: i32, %arg2: i32, %arg3: i32) -> (i32, i32) {
    %c0_i32 = arith.constant 0 : i32
    %c0_i32_0 = arith.constant 0 : i32
    %c0_i32_1 = arith.constant 0 : i32
    return %c0_i32, %c0_i32_0 : i32, i32
  }
  func.func @transform_9(%arg0: i32, %arg1: i32, %arg2: i32, %arg3: i32) -> (i32, i32, i32) {
    %c0_i32 = arith.constant 0 : i32
    %c0_i32_0 = arith.constant 0 : i32
    return %arg0, %arg1, %c0_i32 : i32, i32, i32
  }
  func.func @transform_10(%arg0: i32, %arg1: i32, %arg2: i32, %arg3: i32) -> (i32, i32, i32) {
    %c0_i32 = arith.constant 0 : i32
    %c0_i32_0 = arith.constant 0 : i32
    return %arg0, %arg1, %c0_i32 : i32, i32, i32
  }
}

module attributes {stable_mosaic.version = 11 : i64} {
  func.func @ln_ffn_kernel(%arg0: i32, %arg1: i32, %arg2: memref<8x32xf32, #tpu.memory_space<vmem>>, %arg3: memref<1x32xf32, #tpu.memory_space<vmem>>, %arg4: memref<1x32xf32, #tpu.memory_space<vmem>>, %arg5: memref<32x128xbf16, #tpu.memory_space<vmem>>, %arg6: memref<1x128xf32, #tpu.memory_space<vmem>>, %arg7: memref<128x32xbf16, #tpu.memory_space<vmem>>, %arg8: memref<1x32xf32, #tpu.memory_space<vmem>>, %arg9: memref<8x32xf32, #tpu.memory_space<vmem>>, %arg10: memref<8x32xf32, #tpu.memory_space<vmem>>, %arg11: memref<8x32xbf16, #tpu.memory_space<vmem>>) attributes {dimension_semantics = [#tpu.dimension_semantics<parallel>, #tpu.dimension_semantics<arbitrary>], iteration_bounds = array<i64: 2, 1>, scalar_prefetch = 0 : i64, scratch_operands = 2 : i64, tpu.core_type = #tpu.core_type<tc>, window_params = [{transform_indices = @transform_0, window_bounds = array<i64: 8, 32>}, {pipeline_mode = #tpu.pipeline_mode<synchronous>, transform_indices = @transform_1, window_bounds = array<i64: 1, 32>}, {pipeline_mode = #tpu.pipeline_mode<synchronous>, transform_indices = @transform_2, window_bounds = array<i64: 1, 32>}, {transform_indices = @transform_3, window_bounds = array<i64: 32, 128>}, {transform_indices = @transform_4, window_bounds = array<i64: 1, 128>}, {transform_indices = @transform_5, window_bounds = array<i64: 128, 32>}, {pipeline_mode = #tpu.pipeline_mode<synchronous>, transform_indices = @transform_6, window_bounds = array<i64: 1, 32>}, {transform_indices = @transform_7, window_bounds = array<i64: 8, 32>}]} {
    %c0_i32 = arith.constant 0 : i32
    %0 = arith.cmpi eq, %arg1, %c0_i32 : i32
    %1 = arith.extui %0 : i1 to i32
    %c0_i32_0 = arith.constant 0 : i32
    %2 = arith.cmpi ne, %1, %c0_i32_0 : i32
    scf.if %2 {
      %cst_19 = arith.constant 0.000000e+00 : f32
      %31 = vector.broadcast %cst_19 : f32 to vector<8x32xf32>
      %c0_20 = arith.constant 0 : index
      %c0_21 = arith.constant 0 : index
      %32 = vector.load %arg10[%c0_20, %c0_21] : memref<8x32xf32, #tpu.memory_space<vmem>>, vector<8x32xf32>
      tpu.vector_store %arg10[%c0_20, %c0_21], %31 {strides = array<i32>} : memref<8x32xf32, #tpu.memory_space<vmem>>, vector<8x32xf32>,
      %c0_22 = arith.constant 0 : index
      %c0_23 = arith.constant 0 : index
      %33 = vector.load %arg2[%c0_22, %c0_23] : memref<8x32xf32, #tpu.memory_space<vmem>>, vector<8x32xf32>
      %c0_24 = arith.constant 0 : index
      %c0_25 = arith.constant 0 : index
      %34 = vector.load %arg3[%c0_24, %c0_25] : memref<1x32xf32, #tpu.memory_space<vmem>>, vector<1x32xf32>
      %c0_26 = arith.constant 0 : index
      %c0_27 = arith.constant 0 : index
      %35 = vector.load %arg4[%c0_26, %c0_27] : memref<1x32xf32, #tpu.memory_space<vmem>>, vector<1x32xf32>
      %cst_28 = arith.constant dense<0.000000e+00> : vector<8xf32>
      %36 = vector.multi_reduction <add>, %33, %cst_28 [1] : vector<8x32xf32> to vector<8xf32>
      %37 = vector.shape_cast %36 : vector<8xf32> to vector<8x1xf32>
      %cst_29 = arith.constant 3.200000e+01 : f32
      %38 = vector.broadcast %cst_29 : f32 to vector<8x1xf32>
      %39 = arith.divf %37, %38 : vector<8x1xf32>
      %40 = vector.broadcast %39 : vector<8x1xf32> to vector<8x32xf32>
      %41 = arith.subf %33, %40 : vector<8x32xf32>
      %42 = arith.mulf %41, %41 : vector<8x32xf32>
      %cst_30 = arith.constant dense<0.000000e+00> : vector<8xf32>
      %43 = vector.multi_reduction <add>, %42, %cst_30 [1] : vector<8x32xf32> to vector<8xf32>
      %44 = vector.shape_cast %43 : vector<8xf32> to vector<8x1xf32>
      %cst_31 = arith.constant 3.200000e+01 : f32
      %45 = vector.broadcast %cst_31 : f32 to vector<8x1xf32>
      %46 = arith.divf %44, %45 : vector<8x1xf32>
      %47 = vector.broadcast %39 : vector<8x1xf32> to vector<8x32xf32>
      %48 = arith.subf %33, %47 : vector<8x32xf32>
      %cst_32 = arith.constant 9.99999974E-6 : f32
      %49 = vector.broadcast %cst_32 : f32 to vector<8x1xf32>
      %50 = arith.addf %46, %49 : vector<8x1xf32>
      %51 = math.rsqrt %50 : vector<8x1xf32>
      %52 = vector.broadcast %51 : vector<8x1xf32> to vector<8x32xf32>
      %53 = arith.mulf %48, %52 : vector<8x32xf32>
      %54 = vector.broadcast %34 : vector<1x32xf32> to vector<8x32xf32>
      %55 = arith.mulf %53, %54 : vector<8x32xf32>
      %56 = vector.broadcast %35 : vector<1x32xf32> to vector<8x32xf32>
      %57 = arith.addf %55, %56 : vector<8x32xf32>
      %58 = arith.truncf %57 : vector<8x32xf32> to vector<8x32xbf16>
      %c0_33 = arith.constant 0 : index
      %c0_34 = arith.constant 0 : index
      %59 = vector.load %arg11[%c0_33, %c0_34] : memref<8x32xbf16, #tpu.memory_space<vmem>>, vector<8x32xbf16>
      tpu.vector_store %arg11[%c0_33, %c0_34], %58 {strides = array<i32>} : memref<8x32xbf16, #tpu.memory_space<vmem>>, vector<8x32xbf16>,
    } else {
    }
    %c0 = arith.constant 0 : index
    %c0_1 = arith.constant 0 : index
    %3 = vector.load %arg11[%c0, %c0_1] : memref<8x32xbf16, #tpu.memory_space<vmem>>, vector<8x32xbf16>
    %c0_2 = arith.constant 0 : index
    %c0_3 = arith.constant 0 : index
    %4 = vector.load %arg5[%c0_2, %c0_3] : memref<32x128xbf16, #tpu.memory_space<vmem>>, vector<32x128xbf16>
    %cst = arith.constant dense<0.000000e+00> : vector<8x128xf32>
    %5 = tpu.matmul %3, %4, %cst {dimension_numbers = #tpu.dot_dimension_numbers<[1], [0], [0], [1], [0, 0, 1, 1], [], []>} : vector<8x32xbf16>, vector<32x128xbf16>, vector<8x128xf32> -> vector<8x128xf32>
    %c0_4 = arith.constant 0 : index
    %c0_5 = arith.constant 0 : index
    %6 = vector.load %arg6[%c0_4, %c0_5] : memref<1x128xf32, #tpu.memory_space<vmem>>, vector<1x128xf32>
    %7 = vector.broadcast %6 : vector<1x128xf32> to vector<8x128xf32>
    %8 = arith.addf %5, %7 : vector<8x128xf32>
    %9 = arith.mulf %8, %8 : vector<8x128xf32>
    %10 = arith.mulf %8, %9 : vector<8x128xf32>
    %cst_6 = arith.constant 4.471500e-02 : f32
    %11 = vector.broadcast %cst_6 : f32 to vector<8x128xf32>
    %12 = arith.mulf %11, %10 : vector<8x128xf32>
    %13 = arith.addf %8, %12 : vector<8x128xf32>
    %cst_7 = arith.constant 0.797884583 : f32
    %14 = vector.broadcast %cst_7 : f32 to vector<8x128xf32>
    %15 = arith.mulf %14, %13 : vector<8x128xf32>
    %16 = math.tanh %15 : vector<8x128xf32>
    %cst_8 = arith.constant 1.000000e+00 : f32
    %17 = vector.broadcast %cst_8 : f32 to vector<8x128xf32>
    %18 = arith.addf %17, %16 : vector<8x128xf32>
    %cst_9 = arith.constant 5.000000e-01 : f32
    %19 = vector.broadcast %cst_9 : f32 to vector<8x128xf32>
    %20 = arith.mulf %19, %18 : vector<8x128xf32>
    %21 = arith.mulf %8, %20 : vector<8x128xf32>
    %c0_10 = arith.constant 0 : index
    %c0_11 = arith.constant 0 : index
    %22 = vector.load %arg10[%c0_10, %c0_11] : memref<8x32xf32, #tpu.memory_space<vmem>>, vector<8x32xf32>
    %23 = arith.truncf %21 : vector<8x128xf32> to vector<8x128xbf16>
    %c0_12 = arith.constant 0 : index
    %c0_13 = arith.constant 0 : index
    %24 = vector.load %arg7[%c0_12, %c0_13] : memref<128x32xbf16, #tpu.memory_space<vmem>>, vector<128x32xbf16>
    %cst_14 = arith.constant dense<0.000000e+00> : vector<8x32xf32>
    %25 = tpu.matmul %23, %24, %cst_14 {dimension_numbers = #tpu.dot_dimension_numbers<[1], [0], [0], [1], [0, 0, 1, 1], [], []>} : vector<8x128xbf16>, vector<128x32xbf16>, vector<8x32xf32> -> vector<8x32xf32>
    %26 = arith.addf %22, %25 : vector<8x32xf32>
    %c0_15 = arith.constant 0 : index
    %c0_16 = arith.constant 0 : index
    %27 = vector.load %arg10[%c0_15, %c0_16] : memref<8x32xf32, #tpu.memory_space<vmem>>, vector<8x32xf32>
    tpu.vector_store %arg10[%c0_15, %c0_16], %26 {strides = array<i32>} : memref<8x32xf32, #tpu.memory_space<vmem>>, vector<8x32xf32>,
    %c0_i32_17 = arith.constant 0 : i32
    %28 = arith.cmpi eq, %arg1, %c0_i32_17 : i32
    %29 = arith.extui %28 : i1 to i32
    %c0_i32_18 = arith.constant 0 : i32
    %30 = arith.cmpi ne, %29, %c0_i32_18 : i32
    scf.if %30 {
      %c0_19 = arith.constant 0 : index
      %c0_20 = arith.constant 0 : index
      %31 = vector.load %arg10[%c0_19, %c0_20] : memref<8x32xf32, #tpu.memory_space<vmem>>, vector<8x32xf32>
      %c0_21 = arith.constant 0 : index
      %c0_22 = arith.constant 0 : index
      %32 = vector.load %arg8[%c0_21, %c0_22] : memref<1x32xf32, #tpu.memory_space<vmem>>, vector<1x32xf32>
      %33 = vector.broadcast %32 : vector<1x32xf32> to vector<8x32xf32>
      %34 = arith.addf %31, %33 : vector<8x32xf32>
      %c0_23 = arith.constant 0 : index
      %c0_24 = arith.constant 0 : index
      %35 = vector.load %arg2[%c0_23, %c0_24] : memref<8x32xf32, #tpu.memory_space<vmem>>, vector<8x32xf32>
      %36 = arith.addf %34, %35 : vector<8x32xf32>
      %c0_25 = arith.constant 0 : index
      %c0_26 = arith.constant 0 : index
      %37 = vector.load %arg9[%c0_25, %c0_26] : memref<8x32xf32, #tpu.memory_space<vmem>>, vector<8x32xf32>
      tpu.vector_store %arg9[%c0_25, %c0_26], %36 {strides = array<i32>} : memref<8x32xf32, #tpu.memory_space<vmem>>, vector<8x32xf32>,
    } else {
    }
    return
  }
  func.func @transform_0(%arg0: i32, %arg1: i32) -> (i32, i32) {
    %c0_i32 = arith.constant 0 : i32
    %c0_i32_0 = arith.constant 0 : i32
    return %arg0, %c0_i32 : i32, i32
  }
  func.func @transform_1(%arg0: i32, %arg1: i32) -> (i32, i32) {
    %c0_i32 = arith.constant 0 : i32
    %c0_i32_0 = arith.constant 0 : i32
    %c0_i32_1 = arith.constant 0 : i32
    return %c0_i32, %c0_i32_0 : i32, i32
  }
  func.func @transform_2(%arg0: i32, %arg1: i32) -> (i32, i32) {
    %c0_i32 = arith.constant 0 : i32
    %c0_i32_0 = arith.constant 0 : i32
    %c0_i32_1 = arith.constant 0 : i32
    return %c0_i32, %c0_i32_0 : i32, i32
  }
  func.func @transform_3(%arg0: i32, %arg1: i32) -> (i32, i32) {
    %c0_i32 = arith.constant 0 : i32
    %c0_i32_0 = arith.constant 0 : i32
    return %c0_i32, %arg1 : i32, i32
  }
  func.func @transform_4(%arg0: i32, %arg1: i32) -> (i32, i32) {
    %c0_i32 = arith.constant 0 : i32
    %c0_i32_0 = arith.constant 0 : i32
    return %c0_i32, %arg1 : i32, i32
  }
  func.func @transform_5(%arg0: i32, %arg1: i32) -> (i32, i32) {
    %c0_i32 = arith.constant 0 : i32
    %c0_i32_0 = arith.constant 0 : i32
    return %arg1, %c0_i32 : i32, i32
  }
  func.func @transform_6(%arg0: i32, %arg1: i32) -> (i32, i32) {
    %c0_i32 = arith.constant 0 : i32
    %c0_i32_0 = arith.constant 0 : i32
    %c0_i32_1 = arith.constant 0 : i32
    return %c0_i32, %c0_i32_0 : i32, i32
  }
  func.func @transform_7(%arg0: i32, %arg1: i32) -> (i32, i32) {
    %c0_i32 = arith.constant 0 : i32
    %c0_i32_0 = arith.constant 0 : i32
    return %arg0, %c0_i32 : i32, i32
  }
}

</mosaic_0001>

<llo_original>
// kernel: transformer_block.4
$region0: #{transformer_block.4}
  #allocation0 [shape = 'u32[]', space=smem, size = 0x4, offset = 0x4, fixed_abs, tag = 'smem constant byte address 0x4 - core index']
  #allocation1 [shape = 'u32[72,128]{1,0:T(1,128)}', space=vmem, size = 0x9000, scoped, tag = 'internal scratch']
  #allocation2 [shape = 'bf16[8,16]{1,0:T(8,128)(2,1)}', space=vmem, size = 0x800, scoped, tag = 'scratch operand']
  #allocation3 [shape = 'f32[8,1]{1,0:T(8,128)}', space=vmem, size = 0x1000, scoped, tag = 'scratch operand']
  #allocation4 [shape = 'f32[8,1]{1,0:T(8,128)}', space=vmem, size = 0x1000, scoped, tag = 'scratch operand']
  #allocation5 [shape = 'f32[8,16]{1,0:T(8,128)}', space=vmem, size = 0x1000, scoped, tag = 'scratch operand']
  #allocation6 [shape = 'f32[8,32]{1,0:T(8,128)}', space=vmem, size = 0x1000, scoped, tag = 'scratch operand']
  %s0 = inlined_call_operand.vmem [shape: bf16[3,2,2,8,16], index: 0, kind: input, shape index: {}, may-alias: {0,1,2}]
  %s1 = inlined_call_operand.vmem [shape: bf16[3,2,2,8,16], index: 1, kind: input, shape index: {}, may-alias: {0,1,2}]
  %s2 = inlined_call_operand.vmem [shape: bf16[3,2,2,8,16], index: 2, kind: input, shape index: {}, may-alias: {0,1,2}]
  %s3 = inlined_call_operand.vmem [shape: f32[8,16], index: 3, kind: input, shape index: {}, may-alias: {3,5}]
  %s4 = inlined_call_operand.vmem [shape: f32[8,16], index: 4, kind: input, shape index: {}, may-alias: {4,6}]
  %s5 = inlined_call_operand.vmem [shape: f32[8,16], index: 5, kind: input, shape index: {}, may-alias: {3,5}]
  %s6 = inlined_call_operand.vmem [shape: f32[8,16], index: 6, kind: input, shape index: {}, may-alias: {4,6}]
  %s7 = inlined_call_operand.vmem [shape: bf16[32,32], index: 7, kind: input, shape index: {}]
  %s8 = inlined_call_operand.vmem [shape: f32[1,32], index: 8, kind: input, shape index: {}]
  %s9 = inlined_call_operand.vmem [shape: f32[2,8,32], index: 9, kind: input, shape index: {}]
  %s10 = inlined_call_operand.vmem [shape: f32[2,8,32], index: 10, kind: output, shape index: {}]
  %s11 = sld [smem:[#allocation0]]
  $region97: #{transformer_block.4} parent=0
    _
  %s13 = ssub.s32 1, %s11
  %s14 = scalar_select 0, %s13, %s11
  loop: start=0, step=1, limit=6
  $region2: #{transformer_block.4} parent=0 // loop_pre_header
    _
  $region3: #{transformer_block.4} parent=0 // loop_header
    %s16 = sphi 0, %s20
    %p17 = scmp.ge.s32.totalorder %s16, 6
    %s23 = sphi 0, %s49
    %s24 = sphi 0, %s45
    %s25 = sphi 0, %s41
    %s26 = sphi 0, %s37
    %s27 = sphi 0, %s23
    %s28 = sphi 0, %s24
    %s29 = sphi 0, %s25
    %s30 = sphi 0, %s26
    %s31 = sphi 0, %s27
    %s32 = sphi 0, %s28
    %s33 = sphi 0, %s29
    %s34 = sphi 0, %s30
    %s56 = sphi 0, %s58
    %s59 = sphi 0, %s56
    %s60 = sphi 0, %s59
    %s76 = sphi 0, %s60
    %s86 = sphi 0, %s88
    %s89 = sphi 0, %s86
    %s90 = sphi 0, %s89
    %s106 = sphi 0, %s90
    %s116 = sphi 0, %s118
    %s119 = sphi 0, %s116
    %s120 = sphi 0, %s119
    %s136 = sphi 0, %s120
    %s142 = sphi 0, %s144
    %s145 = sphi 0, %s142
    %s146 = sphi 0, %s145
    %s162 = sphi 0, %s146
    %s168 = sphi 0, %s170
    %s171 = sphi 0, %s168
    %s172 = sphi 0, %s171
    %s188 = sphi 0, %s172
    %s194 = sphi 0, %s196
    %s197 = sphi 0, %s194
    %s198 = sphi 0, %s197
    %s214 = sphi 0, %s198
    %s220 = sphi 0, %s222
    %s223 = sphi 0, %s220
    %s224 = sphi 0, %s223
    %s240 = sphi 0, %s224
    %s244 = sphi 0, %s244
    %s246 = sphi 0, %s244
    %s247 = sphi 0, %s246
    %s261 = sphi 0, %s247
    %s265 = sphi 0, %s265
    %s267 = sphi 0, %s265
    %s268 = sphi 0, %s267
    %s282 = sphi 0, %s268
    %s290 = sphi 0, %s292
    %s293 = sphi 0, %s290
    %s294 = sphi 0, %s293
    %s310 = sphi 0, %s294
    %s318 = sphi 0, %s320
    %s321 = sphi 0, %s318
    %s322 = sphi 0, %s321
    %s338 = sphi 0, %s322
  $region4: #{transformer_block.4} parent=0 // loop_header_branch
    %19 = sbr.rel (%p17) target = $region8
  $region5: #{transformer_block.4} parent=0 // loop_body
    %s21 = ssub.s32 %s16, 1
    %s22 = ssub.s32 %s16, 2
    %s35 = sadd.s32 1, %s26
    %p36 = scmp.ge.s32.totalorder %s35, 1
    %s37 = scalar_select %p36, 0, %s35
    %s38 = sadd.s32 1, %s25
    %s39 = scalar_select %p36, %s38, %s25
    %p40 = scmp.ge.s32.totalorder %s39, 2
    %s41 = scalar_select %p40, 0, %s39
    %s42 = sadd.s32 1, %s24
    %s43 = scalar_select %p40, %s42, %s24
    %p44 = scmp.ge.s32.totalorder %s43, 1
    %s45 = scalar_select %p44, 0, %s43
    %s46 = sadd.s32 1, %s23
    %s47 = scalar_select %p44, %s46, %s23
    %p48 = scmp.ge.s32.totalorder %s47, 2
    %s49 = scalar_select %p48, 0, %s47
    %s50 = ssub.s32 %s23, %s49
    %s51 = ssub.s32 %s25, %s41
    %s52 = sor.u32 %s50, %s51
    %s53 = ssub.s32 %s24, %s45
    %s54 = sor.u32 %s52, %s53
    %p55 = scmp.eq.s32.totalorder %s54, 0
    %s57 = sadd.s32 %s56, 1
    %s58 = scalar_select %p55, %s56, %s57
    %p61 = pneg %p55
    %p62 = scmp.eq.s32.totalorder %s16, 3
    %p63 = por %p61, %p62
    %p64 = scmp.ne.s32.totalorder %s56, %s59
    %p65 = scmp.eq.s32.totalorder %s16, 0
    %p66 = por %p64, %p65
    %p67 = scmp.ne.s32.totalorder %s56, %s59
    %p68 = scmp.eq.s32.totalorder %s21, 3
    %p69 = por %p67, %p68
    %p70 = scmp.ne.s32.totalorder %s59, %s60
    %p71 = scmp.eq.s32.totalorder %s21, 0
    %p72 = por %p70, %p71
    %p73 = scmp.ne.s32.totalorder %s59, %s60
    %p74 = scmp.eq.s32.totalorder %s22, 3
    %p75 = por %p73, %p74
    %p77 = scmp.ne.s32.totalorder %s60, %s76
    %p78 = scmp.eq.s32.totalorder %s22, 0
    %p79 = por %p77, %p78
    %s80 = ssub.s32 %s23, %s49
    %s81 = ssub.s32 %s25, %s41
    %s82 = sor.u32 %s80, %s81
    %s83 = ssub.s32 %s26, %s37
    %s84 = sor.u32 %s82, %s83
    %p85 = scmp.eq.s32.totalorder %s84, 0
    %s87 = sadd.s32 %s86, 1
    %s88 = scalar_select %p85, %s86, %s87
    %p91 = pneg %p85
    %p92 = scmp.eq.s32.totalorder %s16, 3
    %p93 = por %p91, %p92
    %p94 = scmp.ne.s32.totalorder %s86, %s89
    %p95 = scmp.eq.s32.totalorder %s16, 0
    %p96 = por %p94, %p95
    %p97 = scmp.ne.s32.totalorder %s86, %s89
    %p98 = scmp.eq.s32.totalorder %s21, 3
    %p99 = por %p97, %p98
    %p100 = scmp.ne.s32.totalorder %s89, %s90
    %p101 = scmp.eq.s32.totalorder %s21, 0
    %p102 = por %p100, %p101
    %p103 = scmp.ne.s32.totalorder %s89, %s90
    %p104 = scmp.eq.s32.totalorder %s22, 3
    %p105 = por %p103, %p104
    %p107 = scmp.ne.s32.totalorder %s90, %s106
    %p108 = scmp.eq.s32.totalorder %s22, 0
    %p109 = por %p107, %p108
    %s110 = ssub.s32 %s23, %s49
    %s111 = ssub.s32 %s25, %s41
    %s112 = sor.u32 %s110, %s111
    %s113 = ssub.s32 %s26, %s37
    %s114 = sor.u32 %s112, %s113
    %p115 = scmp.eq.s32.totalorder %s114, 0
    %s117 = sadd.s32 %s116, 1
    %s118 = scalar_select %p115, %s116, %s117
    %p121 = pneg %p115
    %p122 = scmp.eq.s32.totalorder %s16, 3
    %p123 = por %p121, %p122
    %p124 = scmp.ne.s32.totalorder %s116, %s119
    %p125 = scmp.eq.s32.totalorder %s16, 0
    %p126 = por %p124, %p125
    %p127 = scmp.ne.s32.totalorder %s116, %s119
    %p128 = scmp.eq.s32.totalorder %s21, 3
    %p129 = por %p127, %p128
    %p130 = scmp.ne.s32.totalorder %s119, %s120
    %p131 = scmp.eq.s32.totalorder %s21, 0
    %p132 = por %p130, %p131
    %p133 = scmp.ne.s32.totalorder %s119, %s120
    %p134 = scmp.eq.s32.totalorder %s22, 3
    %p135 = por %p133, %p134
    %p137 = scmp.ne.s32.totalorder %s120, %s136
    %p138 = scmp.eq.s32.totalorder %s22, 0
    %p139 = por %p137, %p138
    %s140 = ssub.s32 %s24, %s45
    %p141 = scmp.eq.s32.totalorder %s140, 0
    %s143 = sadd.s32 %s142, 1
    %s144 = scalar_select %p141, %s142, %s143
    %p147 = pneg %p141
    %p148 = scmp.eq.s32.totalorder %s16, 3
    %p149 = por %p147, %p148
    %p150 = scmp.ne.s32.totalorder %s142, %s145
    %p151 = scmp.eq.s32.totalorder %s16, 0
    %p152 = por %p150, %p151
    %p153 = scmp.ne.s32.totalorder %s142, %s145
    %p154 = scmp.eq.s32.totalorder %s21, 3
    %p155 = por %p153, %p154
    %p156 = scmp.ne.s32.totalorder %s145, %s146
    %p157 = scmp.eq.s32.totalorder %s21, 0
    %p158 = por %p156, %p157
    %p159 = scmp.ne.s32.totalorder %s145, %s146
    %p160 = scmp.eq.s32.totalorder %s22, 3
    %p161 = por %p159, %p160
    %p163 = scmp.ne.s32.totalorder %s146, %s162
    %p164 = scmp.eq.s32.totalorder %s22, 0
    %p165 = por %p163, %p164
    %s166 = ssub.s32 %s24, %s45
    %p167 = scmp.eq.s32.totalorder %s166, 0
    %s169 = sadd.s32 %s168, 1
    %s170 = scalar_select %p167, %s168, %s169
    %p173 = pneg %p167
    %p174 = scmp.eq.s32.totalorder %s16, 3
    %p175 = por %p173, %p174
    %p176 = scmp.ne.s32.totalorder %s168, %s171
    %p177 = scmp.eq.s32.totalorder %s16, 0
    %p178 = por %p176, %p177
    %p179 = scmp.ne.s32.totalorder %s168, %s171
    %p180 = scmp.eq.s32.totalorder %s21, 3
    %p181 = por %p179, %p180
    %p182 = scmp.ne.s32.totalorder %s171, %s172
    %p183 = scmp.eq.s32.totalorder %s21, 0
    %p184 = por %p182, %p183
    %p185 = scmp.ne.s32.totalorder %s171, %s172
    %p186 = scmp.eq.s32.totalorder %s22, 3
    %p187 = por %p185, %p186
    %p189 = scmp.ne.s32.totalorder %s172, %s188
    %p190 = scmp.eq.s32.totalorder %s22, 0
    %p191 = por %p189, %p190
    %s192 = ssub.s32 %s26, %s37
    %p193 = scmp.eq.s32.totalorder %s192, 0
    %s195 = sadd.s32 %s194, 1
    %s196 = scalar_select %p193, %s194, %s195
    %p199 = pneg %p193
    %p200 = scmp.eq.s32.totalorder %s16, 3
    %p201 = por %p199, %p200
    %p202 = scmp.ne.s32.totalorder %s194, %s197
    %p203 = scmp.eq.s32.totalorder %s16, 0
    %p204 = por %p202, %p203
    %p205 = scmp.ne.s32.totalorder %s194, %s197
    %p206 = scmp.eq.s32.totalorder %s21, 3
    %p207 = por %p205, %p206
    %p208 = scmp.ne.s32.totalorder %s197, %s198
    %p209 = scmp.eq.s32.totalorder %s21, 0
    %p210 = por %p208, %p209
    %p211 = scmp.ne.s32.totalorder %s197, %s198
    %p212 = scmp.eq.s32.totalorder %s22, 3
    %p213 = por %p211, %p212
    %p215 = scmp.ne.s32.totalorder %s198, %s214
    %p216 = scmp.eq.s32.totalorder %s22, 0
    %p217 = por %p215, %p216
    %s218 = ssub.s32 %s26, %s37
    %p219 = scmp.eq.s32.totalorder %s218, 0
    %s221 = sadd.s32 %s220, 1
    %s222 = scalar_select %p219, %s220, %s221
    %p225 = pneg %p219
    %p226 = scmp.eq.s32.totalorder %s16, 3
    %p227 = por %p225, %p226
    %p228 = scmp.ne.s32.totalorder %s220, %s223
    %p229 = scmp.eq.s32.totalorder %s16, 0
    %p230 = por %p228, %p229
    %p231 = scmp.ne.s32.totalorder %s220, %s223
    %p232 = scmp.eq.s32.totalorder %s21, 3
    %p233 = por %p231, %p232
    %p234 = scmp.ne.s32.totalorder %s223, %s224
    %p235 = scmp.eq.s32.totalorder %s21, 0
    %p236 = por %p234, %p235
    %p237 = scmp.ne.s32.totalorder %s223, %s224
    %p238 = scmp.eq.s32.totalorder %s22, 3
    %p239 = por %p237, %p238
    %p241 = scmp.ne.s32.totalorder %s224, %s240
    %p242 = scmp.eq.s32.totalorder %s22, 0
    %p243 = por %p241, %p242
    %s245 = sadd.s32 %s244, 1
    %p248 = scmp.eq.s32.totalorder %s16, 3
    %p249 = scmp.ne.s32.totalorder %s244, %s246
    %p250 = scmp.eq.s32.totalorder %s16, 0
    %p251 = por %p249, %p250
    %p252 = scmp.ne.s32.totalorder %s244, %s246
    %p253 = scmp.eq.s32.totalorder %s21, 3
    %p254 = por %p252, %p253
    %p255 = scmp.ne.s32.totalorder %s246, %s247
    %p256 = scmp.eq.s32.totalorder %s21, 0
    %p257 = por %p255, %p256
    %p258 = scmp.ne.s32.totalorder %s246, %s247
    %p259 = scmp.eq.s32.totalorder %s22, 3
    %p260 = por %p258, %p259
    %p262 = scmp.ne.s32.totalorder %s247, %s261
    %p263 = scmp.eq.s32.totalorder %s22, 0
    %p264 = por %p262, %p263
    %s266 = sadd.s32 %s265, 1
    %p269 = scmp.eq.s32.totalorder %s16, 3
    %p270 = scmp.ne.s32.totalorder %s265, %s267
    %p271 = scmp.eq.s32.totalorder %s16, 0
    %p272 = por %p270, %p271
    %p273 = scmp.ne.s32.totalorder %s265, %s267
    %p274 = scmp.eq.s32.totalorder %s21, 3
    %p275 = por %p273, %p274
    %p276 = scmp.ne.s32.totalorder %s267, %s268
    %p277 = scmp.eq.s32.totalorder %s21, 0
    %p278 = por %p276, %p277
    %p279 = scmp.ne.s32.totalorder %s267, %s268
    %p280 = scmp.eq.s32.totalorder %s22, 3
    %p281 = por %p279, %p280
    %p283 = scmp.ne.s32.totalorder %s268, %s282
    %p284 = scmp.eq.s32.totalorder %s22, 0
    %p285 = por %p283, %p284
    %s286 = ssub.s32 %s23, %s49
    %s287 = ssub.s32 %s24, %s45
    %s288 = sor.u32 %s286, %s287
    %p289 = scmp.eq.s32.totalorder %s288, 0
    %s291 = sadd.s32 %s290, 1
    %s292 = scalar_select %p289, %s290, %s291
    %p295 = pneg %p289
    %p296 = scmp.eq.s32.totalorder %s16, 3
    %p297 = por %p295, %p296
    %p298 = scmp.ne.s32.totalorder %s290, %s293
    %p299 = scmp.eq.s32.totalorder %s16, 0
    %p300 = por %p298, %p299
    %p301 = scmp.ne.s32.totalorder %s290, %s293
    %p302 = scmp.eq.s32.totalorder %s21, 3
    %p303 = por %p301, %p302
    %p304 = scmp.ne.s32.totalorder %s293, %s294
    %p305 = scmp.eq.s32.totalorder %s21, 0
    %p306 = por %p304, %p305
    %p307 = scmp.ne.s32.totalorder %s293, %s294
    %p308 = scmp.eq.s32.totalorder %s22, 3
    %p309 = por %p307, %p308
    %p311 = scmp.ne.s32.totalorder %s294, %s310
    %p312 = scmp.eq.s32.totalorder %s22, 0
    %p313 = por %p311, %p312
    %s314 = ssub.s32 %s23, %s49
    %s315 = ssub.s32 %s24, %s45
    %s316 = sor.u32 %s314, %s315
    %p317 = scmp.eq.s32.totalorder %s316, 0
    %s319 = sadd.s32 %s318, 1
    %s320 = scalar_select %p317, %s318, %s319
    %p323 = pneg %p317
    %p324 = scmp.eq.s32.totalorder %s16, 3
    %p325 = por %p323, %p324
    %p326 = scmp.ne.s32.totalorder %s318, %s321
    %p327 = scmp.eq.s32.totalorder %s16, 0
    %p328 = por %p326, %p327
    %p329 = scmp.ne.s32.totalorder %s318, %s321
    %p330 = scmp.eq.s32.totalorder %s21, 3
    %p331 = por %p329, %p330
    %p332 = scmp.ne.s32.totalorder %s321, %s322
    %p333 = scmp.eq.s32.totalorder %s21, 0
    %p334 = por %p332, %p333
    %p335 = scmp.ne.s32.totalorder %s321, %s322
    %p336 = scmp.eq.s32.totalorder %s22, 3
    %p337 = por %p335, %p336
    %p339 = scmp.ne.s32.totalorder %s322, %s338
    %p340 = scmp.eq.s32.totalorder %s22, 0
    %p341 = por %p339, %p340
    %p342 = scmp.le.s32.totalorder 1, %s16
    %p343 = scmp.lt.s32.totalorder %s16, 5
    %p344 = pnand %p342, %p343
    %p345 = pneg %p344
    // Predicated region
    $region9: #{transformer_block.4} parent=5 // pred_check
      _
    $region10: #{transformer_block.4} parent=5 // pred_check_branch
      %347 = sbr.rel (%p344) target = $region12
    $region11: #{transformer_block.4} parent=5 // pred_region
      %s348 = ssub.s32 %s16, 1
      // Predicated region
      $region13: #{transformer_block.4} parent=11 // pred_check
        %p349 = pneg %p158
      $region14: #{transformer_block.4} parent=11 // pred_check_branch
        %351 = sbr.rel (%p349) target = $region16
      $region15: #{transformer_block.4} parent=11 // pred_region
        %p352 = scmp.lt.s32.totalorder %s28, 0
        %s353 = scalar_select %p352, %s28, 0
        %s354 = smul.addr %s353, 8
        %s355 = scalar_lea.vmem %s3, %s354
      $region16: #{transformer_block.4} parent=11 // pred_fallthru
        _
      // Predicated region
      $region17: #{transformer_block.4} parent=11 // pred_check
        %p356 = pneg %p184
      $region18: #{transformer_block.4} parent=11 // pred_check_branch
        %358 = sbr.rel (%p356) target = $region20
      $region19: #{transformer_block.4} parent=11 // pred_region
        %p359 = scmp.lt.s32.totalorder %s28, 0
        %s360 = scalar_select %p359, %s28, 0
        %s361 = smul.addr %s360, 8
        %s362 = scalar_lea.vmem %s4, %s361
      $region20: #{transformer_block.4} parent=11 // pred_fallthru
        _
      // Predicated region
      $region21: #{transformer_block.4} parent=11 // pred_check
        %p363 = pneg %p210
      $region22: #{transformer_block.4} parent=11 // pred_check_branch
        %365 = sbr.rel (%p363) target = $region24
      $region23: #{transformer_block.4} parent=11 // pred_region
        %p366 = scmp.lt.s32.totalorder %s30, 0
        %s367 = scalar_select %p366, %s30, 0
        %s368 = smul.addr %s367, 8
        %s369 = scalar_lea.vmem %s5, %s368
      $region24: #{transformer_block.4} parent=11 // pred_fallthru
        _
      // Predicated region
      $region25: #{transformer_block.4} parent=11 // pred_check
        %p370 = pneg %p236
      $region26: #{transformer_block.4} parent=11 // pred_check_branch
        %372 = sbr.rel (%p370) target = $region28
      $region27: #{transformer_block.4} parent=11 // pred_region
        %p373 = scmp.lt.s32.totalorder %s30, 0
        %s374 = scalar_select %p373, %s30, 0
        %s375 = smul.addr %s374, 8
        %s376 = scalar_lea.vmem %s6, %s375
      $region28: #{transformer_block.4} parent=11 // pred_fallthru
        _
      // Predicated region
      $region29: #{transformer_block.4} parent=11 // pred_check
        %p377 = pneg %p257
      $region30: #{transformer_block.4} parent=11 // pred_check_branch
        %379 = sbr.rel (%p377) target = $region32
      $region31: #{transformer_block.4} parent=11 // pred_region
        _
      $region32: #{transformer_block.4} parent=11 // pred_fallthru
        _
      // Predicated region
      $region33: #{transformer_block.4} parent=11 // pred_check
        %p380 = pneg %p278
      $region34: #{transformer_block.4} parent=11 // pred_check_branch
        %382 = sbr.rel (%p380) target = $region36
      $region35: #{transformer_block.4} parent=11 // pred_region
        _
      $region36: #{transformer_block.4} parent=11 // pred_fallthru
        _
    $region12: #{transformer_block.4} parent=5 // pred_fallthru
      _
    %p383 = scmp.lt.s32.totalorder %s16, 4
    // Predicated region
    $region37: #{transformer_block.4} parent=5 // pred_check
      %p384 = pneg %p383
    $region38: #{transformer_block.4} parent=5 // pred_check_branch
      %386 = sbr.rel (%p384) target = $region40
    $region39: #{transformer_block.4} parent=5 // pred_region
      // Predicated region
      $region41: #{transformer_block.4} parent=39 // pred_check
        %p387 = pneg %p66
      $region42: #{transformer_block.4} parent=39 // pred_check_branch
        %389 = sbr.rel (%p387) target = $region44
      $region43: #{transformer_block.4} parent=39 // pred_region
        %p390 = scmp.lt.s32.totalorder %s23, 1
        %s391 = scalar_select %p390, %s23, 1
        %p392 = scmp.lt.s32.totalorder %s25, 1
        %s393 = scalar_select %p392, %s25, 1
        %p394 = scmp.lt.s32.totalorder %s24, 0
        %s395 = scalar_select %p394, %s24, 0
        %s396 = sadd.s32 %s395, %s393
        %s397 = smul.addr %s391, 2
        %s398 = sadd.s32 %s396, %s397
        %s399 = smul.addr %s398, 4
        %s400 = scalar_lea.vmem %s0, %s399
      $region44: #{transformer_block.4} parent=39 // pred_fallthru
        _
      // Predicated region
      $region45: #{transformer_block.4} parent=39 // pred_check
        %p401 = pneg %p96
      $region46: #{transformer_block.4} parent=39 // pred_check_branch
        %403 = sbr.rel (%p401) target = $region48
      $region47: #{transformer_block.4} parent=39 // pred_region
        %p404 = scmp.lt.s32.totalorder %s23, 1
        %s405 = scalar_select %p404, %s23, 1
        %p406 = scmp.lt.s32.totalorder %s25, 1
        %s407 = scalar_select %p406, %s25, 1
        %p408 = scmp.lt.s32.totalorder %s26, 0
        %s409 = scalar_select %p408, %s26, 0
        %s410 = sadd.s32 %s409, %s407
        %s411 = smul.addr %s405, 2
        %s412 = sadd.s32 %s410, %s411
        %s413 = sadd.s32 %s412, 4
        %s414 = smul.addr %s413, 4
        %s415 = scalar_lea.vmem %s1, %s414
      $region48: #{transformer_block.4} parent=39 // pred_fallthru
        _
      // Predicated region
      $region49: #{transformer_block.4} parent=39 // pred_check
        %p416 = pneg %p126
      $region50: #{transformer_block.4} parent=39 // pred_check_branch
        %418 = sbr.rel (%p416) target = $region52
      $region51: #{transformer_block.4} parent=39 // pred_region
        %p419 = scmp.lt.s32.totalorder %s23, 1
        %s420 = scalar_select %p419, %s23, 1
        %p421 = scmp.lt.s32.totalorder %s25, 1
        %s422 = scalar_select %p421, %s25, 1
        %p423 = scmp.lt.s32.totalorder %s26, 0
        %s424 = scalar_select %p423, %s26, 0
        %s425 = sadd.s32 %s424, %s422
        %s426 = smul.addr %s420, 2
        %s427 = sadd.s32 %s425, %s426
        %s428 = sadd.s32 %s427, 8
        %s429 = smul.addr %s428, 4
        %s430 = scalar_lea.vmem %s2, %s429
      $region52: #{transformer_block.4} parent=39 // pred_fallthru
        _
      // Predicated region
      $region53: #{transformer_block.4} parent=39 // pred_check
        %p431 = pneg %p300
      $region54: #{transformer_block.4} parent=39 // pred_check_branch
        %433 = sbr.rel (%p431) target = $region56
      $region55: #{transformer_block.4} parent=39 // pred_region
        %p434 = scmp.lt.s32.totalorder %s23, 1
        %s435 = scalar_select %p434, %s23, 1
        %p436 = scmp.lt.s32.totalorder %s24, 0
        %s437 = scalar_select %p436, %s24, 0
        %s438 = sadd.s32 %s437, %s435
        %s439 = smul.addr %s438, 8
        %s440 = scalar_lea.vmem %s9, %s439
      $region56: #{transformer_block.4} parent=39 // pred_fallthru
        _
    $region40: #{transformer_block.4} parent=5 // pred_fallthru
      _
    %p441 = scmp.le.s32.totalorder 1, %s16
    %p442 = scmp.lt.s32.totalorder %s16, 5
    %p443 = pnand %p441, %p442
    %p444 = pneg %p443
    // Predicated region
    $region57: #{transformer_block.4} parent=5 // pred_check
      _
    $region58: #{transformer_block.4} parent=5 // pred_check_branch
      %446 = sbr.rel (%p443) target = $region60
    $region59: #{transformer_block.4} parent=5 // pred_region
      %s447 = ssub.s32 %s16, 1
      %p448 = scmp.lt.s32.totalorder %s27, 1
      %s449 = scalar_select %p448, %s27, 1
      %p450 = scmp.lt.s32.totalorder %s29, 1
      %s451 = scalar_select %p450, %s29, 1
      %p452 = scmp.lt.s32.totalorder %s28, 0
      %s453 = scalar_select %p452, %s28, 0
      %s454 = sadd.s32 %s453, %s451
      %s455 = smul.addr %s449, 2
      %s456 = sadd.s32 %s454, %s455
      %s457 = smul.addr %s456, 4
      %s458 = scalar_lea.vmem %s0, %s457
      %p459 = pneg %p72
      %p460 = pneg %p69
      %p461 = scmp.lt.s32.totalorder %s27, 1
      %s462 = scalar_select %p461, %s27, 1
      %p463 = scmp.lt.s32.totalorder %s29, 1
      %s464 = scalar_select %p463, %s29, 1
      %p465 = scmp.lt.s32.totalorder %s30, 0
      %s466 = scalar_select %p465, %s30, 0
      %s467 = sadd.s32 %s466, %s464
      %s468 = smul.addr %s462, 2
      %s469 = sadd.s32 %s467, %s468
      %s470 = sadd.s32 %s469, 4
      %s471 = smul.addr %s470, 4
      %s472 = scalar_lea.vmem %s1, %s471
      %p473 = pneg %p102
      %p474 = pneg %p99
      %p475 = scmp.lt.s32.totalorder %s27, 1
      %s476 = scalar_select %p475, %s27, 1
      %p477 = scmp.lt.s32.totalorder %s29, 1
      %s478 = scalar_select %p477, %s29, 1
      %p479 = scmp.lt.s32.totalorder %s30, 0
      %s480 = scalar_select %p479, %s30, 0
      %s481 = sadd.s32 %s480, %s478
      %s482 = smul.addr %s476, 2
      %s483 = sadd.s32 %s481, %s482
      %s484 = sadd.s32 %s483, 8
      %s485 = smul.addr %s484, 4
      %s486 = scalar_lea.vmem %s2, %s485
      %p487 = pneg %p132
      %p488 = pneg %p129
      %p489 = scmp.lt.s32.totalorder %s28, 0
      %s490 = scalar_select %p489, %s28, 0
      %s491 = smul.addr %s490, 8
      %s492 = scalar_lea.vmem %s3, %s491
      %p493 = pneg %p158
      %p494 = pneg %p155
      %p495 = scmp.lt.s32.totalorder %s28, 0
      %s496 = scalar_select %p495, %s28, 0
      %s497 = smul.addr %s496, 8
      %s498 = scalar_lea.vmem %s4, %s497
      %p499 = pneg %p184
      %p500 = pneg %p181
      %p501 = scmp.lt.s32.totalorder %s30, 0
      %s502 = scalar_select %p501, %s30, 0
      %s503 = smul.addr %s502, 8
      %s504 = scalar_lea.vmem %s5, %s503
      %p505 = pneg %p210
      %p506 = pneg %p207
      %p507 = scmp.lt.s32.totalorder %s30, 0
      %s508 = scalar_select %p507, %s30, 0
      %s509 = smul.addr %s508, 8
      %s510 = scalar_lea.vmem %s6, %s509
      %p511 = pneg %p236
      %p512 = pneg %p233
      %p513 = pneg %p257
      %p514 = pneg %p254
      %p515 = pneg %p278
      %p516 = pneg %p275
      %p517 = scmp.lt.s32.totalorder %s27, 1
      %s518 = scalar_select %p517, %s27, 1
      %p519 = scmp.lt.s32.totalorder %s28, 0
      %s520 = scalar_select %p519, %s28, 0
      %s521 = sadd.s32 %s520, %s518
      %s522 = smul.addr %s521, 8
      %s523 = scalar_lea.vmem %s9, %s522
      %p524 = pneg %p306
      %p525 = pneg %p303
      %p526 = pneg %p334
      %p527 = pneg %p331
      %p528 = scmp.lt.s32.totalorder %s27, 1
      %s529 = scalar_select %p528, %s27, 1
      %p530 = scmp.lt.s32.totalorder %s28, 0
      %s531 = scalar_select %p530, %s28, 0
      %s532 = sadd.s32 %s531, %s529
      %s533 = smul.addr %s532, 8
      %s534 = scalar_lea.vmem %s10, %s533
      %p535 = scmp.lt.s32.totalorder %s27, 1
      %s536 = scalar_select %p535, %s27, 1
      %p537 = scmp.lt.s32.totalorder %s29, 1
      %s538 = scalar_select %p537, %s29, 1
      %p539 = scmp.lt.s32.totalorder %s28, 0
      %s540 = scalar_select %p539, %s28, 0
      %s541 = sadd.s32 %s540, %s538
      %s542 = smul.addr %s536, 2
      %s543 = sadd.s32 %s541, %s542
      %s544 = smul.addr %s543, 4
      %s545 = scalar_lea.vmem %s0, %s544
      %p546 = scmp.lt.s32.totalorder %s27, 1
      %s547 = scalar_select %p546, %s27, 1
      %p548 = scmp.lt.s32.totalorder %s29, 1
      %s549 = scalar_select %p548, %s29, 1
      %p550 = scmp.lt.s32.totalorder %s30, 0
      %s551 = scalar_select %p550, %s30, 0
      %s552 = sadd.s32 %s551, %s549
      %s553 = smul.addr %s547, 2
      %s554 = sadd.s32 %s552, %s553
      %s555 = sadd.s32 %s554, 4
      %s556 = smul.addr %s555, 4
      %s557 = scalar_lea.vmem %s1, %s556
      %p558 = scmp.lt.s32.totalorder %s27, 1
      %s559 = scalar_select %p558, %s27, 1
      %p560 = scmp.lt.s32.totalorder %s29, 1
      %s561 = scalar_select %p560, %s29, 1
      %p562 = scmp.lt.s32.totalorder %s30, 0
      %s563 = scalar_select %p562, %s30, 0
      %s564 = sadd.s32 %s563, %s561
      %s565 = smul.addr %s559, 2
      %s566 = sadd.s32 %s564, %s565
      %s567 = sadd.s32 %s566, 8
      %s568 = smul.addr %s567, 4
      %s569 = scalar_lea.vmem %s2, %s568
      %p570 = scmp.lt.s32.totalorder %s28, 0
      %s571 = scalar_select %p570, %s28, 0
      %s572 = smul.addr %s571, 8
      %s573 = scalar_lea.vmem %s3, %s572
      %p574 = scmp.lt.s32.totalorder %s28, 0
      %s575 = scalar_select %p574, %s28, 0
      %s576 = smul.addr %s575, 8
      %s577 = scalar_lea.vmem %s4, %s576
      %p578 = scmp.lt.s32.totalorder %s30, 0
      %s579 = scalar_select %p578, %s30, 0
      %s580 = smul.addr %s579, 8
      %s581 = scalar_lea.vmem %s5, %s580
      %p582 = scmp.lt.s32.totalorder %s30, 0
      %s583 = scalar_select %p582, %s30, 0
      %s584 = smul.addr %s583, 8
      %s585 = scalar_lea.vmem %s6, %s584
      %p586 = scmp.lt.s32.totalorder %s27, 1
      %s587 = scalar_select %p586, %s27, 1
      %p588 = scmp.lt.s32.totalorder %s28, 0
      %s589 = scalar_select %p588, %s28, 0
      %s590 = sadd.s32 %s589, %s587
      %s591 = smul.addr %s590, 8
      %s592 = scalar_lea.vmem %s9, %s591
      %p593 = scmp.lt.s32.totalorder %s27, 1
      %s594 = scalar_select %p593, %s27, 1
      %p595 = scmp.lt.s32.totalorder %s28, 0
      %s596 = scalar_select %p595, %s28, 0
      %s597 = sadd.s32 %s596, %s594
      %s598 = smul.addr %s597, 8
      %s599 = scalar_lea.vmem %s10, %s598
      %p601 = scmp.eq.s32.totalorder %s30, 0
      // Predicated region
      $region61: #{transformer_block.4} parent=59 // pred_check
        %p602 = pneg %p601
      $region62: #{transformer_block.4} parent=59 // pred_check_branch
        %604 = sbr.rel (%p602) target = $region64
      $region63: #{transformer_block.4} parent=59 // pred_region
        %vm605 = vcmask 7168
        %606 = vst.msk [vmem:[#allocation3] sm:$0xff] %vm605, -1e+30
        %607 = vst.msk [vmem:[#allocation4] sm:$0xff] %vm605, 0.0
        %vm608 = vcmask 130048
        %609 = vst.msk [vmem:[#allocation5] sm:$0xff] %vm608, 0.0
        %v610 = vld [vmem:[%s545] sm:$0xf]
        %v611 = vunpack.c.l.bf16 %v610
        %v612 = vld [vmem:[%s573] sm:$0xff]
        %v613 = vld [vmem:[%s577] sm:$0xff]
        %v614 = vmul.f32 %v611, %v612
        %616 = vrot.lane.b32.xlu0 %v611, 120
        %v617 = vpop.permute.xlu0 %616
        %619 = vrot.lane.b32.xlu0 %v611, 8
        %v620 = vpop.permute.xlu0 %619
        %vm622 = vcmask 64512
        %v623 = vsel %vm622, %v617, %v620
        %v624 = vmul.f32 %v623, %v613
        %v625 = vadd.f32 %v614, %v624
        %v626 = vmul.f32 %v625, 0.25
        %v627 = vpack.c.bf16 %v626, %v626
        %vm628 = vcmask 125952
        %629 = vst.msk [vmem:[#allocation2] sm:$0xf] %vm628, %v627
      $region64: #{transformer_block.4} parent=59 // pred_fallthru
        _
      %s630 = smul.u32 %s28, 8
      %s631 = ssub.s32 %s630, 2
      %s632 = sadd.s32 %s630, 7
      %s633 = smul.u32 %s30, 8
      %s634 = sadd.s32 %s633, 7
      %p635 = scmp.le.s32.totalorder %s633, %s632
      %p636 = scmp.ge.s32.totalorder %s634, %s631
      %p637 = pnand %p635, %p636
      %p638 = pneg %p637
      // Predicated region
      $region65: #{transformer_block.4} parent=59 // pred_check
        _
      $region66: #{transformer_block.4} parent=59 // pred_check_branch
        %640 = sbr.rel (%p637) target = $region68
      $region67: #{transformer_block.4} parent=59 // pred_region
        %v641 = vld [vmem:[%s557] sm:$0xf]
        %v642 = vunpack.c.l.bf16 %v641
        %v643 = vld [vmem:[%s581] sm:$0xff]
        %v644 = vld [vmem:[%s585] sm:$0xff]
        %v645 = vmul.f32 %v642, %v643
        %647 = vrot.lane.b32.xlu0 %v642, 120
        %v648 = vpop.permute.xlu0 %647
        %650 = vrot.lane.b32.xlu0 %v642, 8
        %v651 = vpop.permute.xlu0 %650
        %vm653 = vcmask 64512
        %v654 = vsel %vm653, %v648, %v651
        %v655 = vmul.f32 %v654, %v644
        %v656 = vadd.f32 %v645, %v655
        %v657 = vpack.c.bf16 %v656, %v656
        %v658 = vld [vmem:[#allocation2] sm:$0xf]
        %vm659 = vcmask 130048
        %v661 = vsel %vm659, %v658, 0
        %v664 = vsel %vm659, %v657, 0
        %666 = vmatpush.bf16.xpose.msra.mxu0 0
        %667 = vmatpush.bf16.xpose.msra.mxu0 0
        %668 = vmatpush.bf16.xpose.msra.mxu0 0
        %669 = vmatpush.bf16.xpose.msra.mxu0 0
        %670 = vmatpush.bf16.xpose.msra.mxu0 0
        %671 = vmatpush.bf16.xpose.msra.mxu0 0
        %672 = vmatpush.bf16.xpose.msra.mxu0 0
        %673 = vmatpush.bf16.xpose.msra.mxu0 %v664
        %674 = vmatmul.bf16.gmra.mxu0 %v661
        %v675 = vpop.f32.mrf.mxu0
        %v676 = vadd.f32 0.0, %v675
        %v677 = vpop.f32.mrf.mxu0
        %678 = vdwg.mxu0
        %v679 = vlaneseq
        %v680 = vshrl.u32 %v679, 7
        %v681 = vstv %s630
        %v682 = vadd.s32 %v681, %v680
        %v683 = vlaneseq
        %v684 = vand.u32 %v683, 127
        %v685 = vstv %s633
        %v686 = vadd.s32 %v685, %v684
        %v687 = vsub.s32 %v682, 2
        %vm688 = vcmp.ge.s32.totalorder %v686, %v687
        %v689 = vadd.s32 %v682, 2
        %vm690 = vcmp.le.s32.totalorder %v686, %v689
        %vm691 = vmand %vm688, %vm690
        %vm692 = vcmp.le.s32.totalorder %v686, %v682
        %vm693 = vmand %vm691, %vm692
        %v694 = vsel %vm693, %v676, -1e+30
        %v695 = vld [vmem:[#allocation3] sm:$0xff]
        %v696 = vsel %vm653, %v694, -inf
        %697 = vmax.xlane.f32.xlu0 %v696
        %v698 = vpop.xlane.xlu0 %697
        %v699 = vmax.f32 %v695, %v698
        %v700 = vsub.f32 %v695, %v699
        %v701 = vmul.f32 %v700, 1.442695
        %v702 = vpow.pop %v701
        %704 = vset.pattern.permute.xlu0 0
        %705 = vperm.xlu0 %704, %v699
        %v706 = vpop.permute.xlu0 %705
        %v708 = vsub.f32 %v694, %v706
        %v709 = vmul.f32 %v708, 1.442695
        %v710 = vpow.pop %v709
        %v711 = vsel %vm693, %v710, 0.0
        %v712 = vld [vmem:[#allocation4] sm:$0xff]
        %v713 = vmul.f32 %v702, %v712
        %v714 = vsel %vm653, %v711, 0.0
        %715 = vadd.xlane.f32.xlu0 %v714
        %v716 = vpop.xlane.xlu0 %715
        %v717 = vadd.f32 %v713, %v716
        %vm718 = vcmask 7168
        %719 = vst.msk [vmem:[#allocation4] sm:$0xff] %vm718, %v717
        %v720 = vld [vmem:[#allocation5] sm:$0xff]
        %722 = vset.pattern.permute.xlu0 0
        %723 = vperm.xlu0 %722, %v702
        %v724 = vpop.permute.xlu0 %723
        %v726 = vmul.f32 %v724, %v720
        %v727 = vpack.c.bf16 %v711, %v711
        %v728 = vld [vmem:[%s569] sm:$0xf]
        %v730 = vsel %vm653, %v727, 0
        %vm732 = vcmask 1043456
        %v734 = vsel %vm732, %v728, 0
        %736 = vmatpush.bf16.msra.mxu0 0
        %737 = vmatpush.bf16.msra.mxu0 0
        %738 = vmatpush.bf16.msra.mxu0 0
        %739 = vmatpush.bf16.msra.mxu0 0
        %740 = vmatpush.bf16.msra.mxu0 0
        %741 = vmatpush.bf16.msra.mxu0 0
        %742 = vmatpush.bf16.msra.mxu0 0
        %743 = vmatpush.bf16.msra.mxu0 %v734
        %744 = vmatmul.bf16.gmra.mxu0 %v730
        %v745 = vpop.f32.mrf.mxu0
        %v746 = vadd.f32 0.0, %v745
        %v747 = vpop.f32.mrf.mxu0
        %748 = vdwg.mxu0
        %v749 = vadd.f32 %v726, %v746
        %750 = vst.msk [vmem:[#allocation5] sm:$0xff] %vm659, %v749
        %751 = vst.msk [vmem:[#allocation3] sm:$0xff] %vm718, %v699
      $region68: #{transformer_block.4} parent=59 // pred_fallthru
        _
      // Predicated region
      $region69: #{transformer_block.4} parent=59 // pred_check
        %p752 = pneg %p601
      $region70: #{transformer_block.4} parent=59 // pred_check_branch
        %754 = sbr.rel (%p752) target = $region72
      $region71: #{transformer_block.4} parent=59 // pred_region
        %v755 = vld [vmem:[#allocation5] sm:$0xff]
        %v756 = vld [vmem:[#allocation4] sm:$0xff]
        %758 = vset.pattern.permute.xlu0 0
        %759 = vperm.xlu0 %758, %v756
        %v760 = vpop.permute.xlu0 %759
        %v762 = vrcp.pop %v760
        %v763 = vmul.f32 %v760, %v762
        %v764 = vsub.f32 1.0, %v763
        %v765 = vmul.f32 %v762, %v764
        %v766 = vadd.f32 %v762, %v765
        %vm767 = vweird.f32 %v760
        %vm768 = vweird.f32 %v762
        %vm769 = vmor %vm767, %vm768
        %v770 = vsel %vm769, %v762, %v766
        %v771 = vand.u32 2147483647, %v760
        %vm772 = vcmp.eq.f32.partialorder %v771, 8.507059e+37
        %v773 = vand.u32 %v760, 2147483648
        %v774 = vor.u32 1.1754944e-38, %v773
        %v775 = vsel %vm772, %v774, %v770
        %v776 = vmul.f32 %v755, %v775
        %p777 = scmp.eq.s32.totalorder %s29, 0
        // Predicated region
        $region73: #{transformer_block.4} parent=71 // pred_check
          %p778 = pneg %p777
        $region74: #{transformer_block.4} parent=71 // pred_check_branch
          %780 = sbr.rel (%p778) target = $region76
        $region75: #{transformer_block.4} parent=71 // pred_region
          %vm781 = vcmask 130048
          %782 = vst.msk [vmem:[#allocation6] sm:$0xff] %vm781, %v776
        $region76: #{transformer_block.4} parent=71 // pred_fallthru
          _
        %p783 = scmp.eq.s32.totalorder %s29, 1
        // Predicated region
        $region77: #{transformer_block.4} parent=71 // pred_check
          %p784 = pneg %p783
        $region78: #{transformer_block.4} parent=71 // pred_check_branch
          %786 = sbr.rel (%p784) target = $region80
        $region79: #{transformer_block.4} parent=71 // pred_region
          %788 = vrot.lane.b32.xlu0 %v776, 16
          %v789 = vpop.permute.xlu0 %788
          %vm791 = vcmask 261248
          %792 = vst.msk [vmem:[#allocation6] sm:$0xff] %vm791, %v789
        $region80: #{transformer_block.4} parent=71 // pred_fallthru
          _
      $region72: #{transformer_block.4} parent=59 // pred_fallthru
        _
      %p793 = scmp.eq.s32.totalorder %s29, 1
      %p794 = pnand %p601, %p793
      %p795 = pneg %p794
      // Predicated region
      $region81: #{transformer_block.4} parent=59 // pred_check
        _
      $region82: #{transformer_block.4} parent=59 // pred_check_branch
        %797 = sbr.rel (%p794) target = $region84
      $region83: #{transformer_block.4} parent=59 // pred_region
        %v798 = vld [vmem:[#allocation6] sm:$0xff]
        %v799 = vpack.c.bf16 %v798, %v798
        %v800 = vld [vmem:[%s7] sm:$0xf]
        %v801 = vld [vmem:[%s7 + $0x4] sm:$0xf]
        %v802 = vld [vmem:[%s7 + $0x8] sm:$0xf]
        %v803 = vld [vmem:[%s7 + $0xc] sm:$0xf]
        %v804 = vld [vmem:[%s8] sm:$0x1]
        %v806 = vperm.slane %v804, 0
        %v812 = vunpack.c.l.b16 %v800
        %v813 = vunpack.c.l.b16 %v801
        %v814 = vunpack.c.l.b16 %v802
        %v815 = vunpack.c.l.b16 %v803
        %v816 = vpack.c.b16 %v813, %v812
        %v817 = vpack.c.b16 %v815, %v814
        %vm820 = vcmask 261120
        %v822 = vsel %vm820, %v799, 0
        %824 = vmatpush.bf16.msra.mxu0 0
        %825 = vmatpush.bf16.msra.mxu0 0
        %826 = vmatpush.bf16.msra.mxu0 0
        %827 = vmatpush.bf16.msra.mxu0 0
        %828 = vmatpush.bf16.msra.mxu0 0
        %829 = vmatpush.bf16.msra.mxu0 0
        %830 = vmatpush.bf16.msra.mxu0 %v817
        %831 = vmatpush.bf16.msra.mxu0 %v816
        %832 = vmatmul.bf16.gmra.mxu0 %v822
        %v833 = vpop.f32.mrf.mxu0
        %v834 = vadd.f32 %v806, %v833
        %v835 = vpop.f32.mrf.mxu0
        %836 = vdwg.mxu0
        %v837 = vld [vmem:[%s592] sm:$0xff]
        %v838 = vadd.f32 %v834, %v837
        %839 = vst.msk [vmem:[%s599] sm:$0xff] %vm820, %v838
      $region84: #{transformer_block.4} parent=59 // pred_fallthru
        _
      %p840 = scmp.lt.s32.totalorder %s27, 1
      %s841 = scalar_select %p840, %s27, 1
      %p842 = scmp.lt.s32.totalorder %s28, 0
      %s843 = scalar_select %p842, %s28, 0
      %s844 = sadd.s32 %s843, %s841
      %s845 = smul.addr %s844, 8
      %s846 = scalar_lea.vmem %s10, %s845
      // Predicated region
      $region85: #{transformer_block.4} parent=59 // pred_check
        %p847 = pneg %p331
      $region86: #{transformer_block.4} parent=59 // pred_check_branch
        %849 = sbr.rel (%p847) target = $region88
      $region87: #{transformer_block.4} parent=59 // pred_region
        _
      $region88: #{transformer_block.4} parent=59 // pred_fallthru
        _
    $region60: #{transformer_block.4} parent=5 // pred_fallthru
      _
    %p850 = scmp.le.s32.totalorder 2, %s16
    // Predicated region
    $region89: #{transformer_block.4} parent=5 // pred_check
      %p851 = pneg %p850
    $region90: #{transformer_block.4} parent=5 // pred_check_branch
      %853 = sbr.rel (%p851) target = $region92
    $region91: #{transformer_block.4} parent=5 // pred_region
      %s854 = ssub.s32 %s16, 2
      // Predicated region
      $region93: #{transformer_block.4} parent=91 // pred_check
        %p855 = pneg %p337
      $region94: #{transformer_block.4} parent=91 // pred_check_branch
        %857 = sbr.rel (%p855) target = $region96
      $region95: #{transformer_block.4} parent=91 // pred_region
        %p858 = scmp.lt.s32.totalorder %s31, 1
        %s859 = scalar_select %p858, %s31, 1
        %p860 = scmp.lt.s32.totalorder %s32, 0
        %s861 = scalar_select %p860, %s32, 0
        %s862 = sadd.s32 %s861, %s859
        %s863 = smul.addr %s862, 8
        %s864 = scalar_lea.vmem %s10, %s863
      $region96: #{transformer_block.4} parent=91 // pred_fallthru
        _
    $region92: #{transformer_block.4} parent=5 // pred_fallthru
      _
  $region6: #{transformer_block.4} parent=0 // loop_footer
    %s20 = sadd.s32 1, %s16
  $region7: #{transformer_block.4} parent=0 // loop_footer_branch
    %15 = sbr.rel target = $region3
  $region8: #{transformer_block.4} parent=0 // loop_exit
    _

// kernel: transformer_block.5
$region0: #{transformer_block.5}
  #allocation0 [shape = 'u32[]', space=smem, size = 0x4, offset = 0x4, fixed_abs, tag = 'smem constant byte address 0x4 - core index']
  #allocation1 [shape = 'u32[72,128]{1,0:T(1,128)}', space=vmem, size = 0x9000, scoped, tag = 'internal scratch']
  #allocation2 [shape = 'f32[8,32]{1,0:T(8,128)}', space=vmem, size = 0x1000, scoped, tag = 'scratch operand']
  #allocation3 [shape = 'bf16[8,32]{1,0:T(8,128)(2,1)}', space=vmem, size = 0x800, scoped, tag = 'scratch operand']
  %s0 = inlined_call_operand.vmem [shape: f32[16,32], index: 0, kind: input, shape index: {}]
  %s1 = inlined_call_operand.vmem [shape: f32[1,32], index: 1, kind: input, shape index: {}]
  %s2 = inlined_call_operand.vmem [shape: f32[1,32], index: 2, kind: input, shape index: {}]
  %s3 = inlined_call_operand.vmem [shape: bf16[32,128], index: 3, kind: input, shape index: {}]
  %s4 = inlined_call_operand.vmem [shape: f32[1,128], index: 4, kind: input, shape index: {}]
  %s5 = inlined_call_operand.vmem [shape: bf16[128,32], index: 5, kind: input, shape index: {}]
  %s6 = inlined_call_operand.vmem [shape: f32[1,32], index: 6, kind: input, shape index: {}]
  %s7 = inlined_call_operand.hbm [shape: f32[16,32], index: 7, kind: output, shape index: {}]
  %s8 = sld [smem:[#allocation0]]
  $region69: #{transformer_block.5} parent=0
    _
  %s10 = ssub.s32 1, %s8
  %s11 = scalar_select 0, %s10, %s8
  $region1: #{transformer_block.5} parent=0
    #allocation4 [shape = 'u8[8192]{0}', space=vmem, size = 0x2000, scoped, tag = 'output window, operand 0']
    #allocation5 [shape = 's32[2]{0}', space=sflag, size = 0x8, scoped, tag = 'scoped memory for transformer_block.5']
    %12 = vsyncpa [#allocation5], 0
    %s13 = scalar_lea.sflag [#allocation5], 1
    %14 = vsyncpa %s13, 0
    loop: start=0, step=1, limit=4
    $region2: #{transformer_block.5} parent=1 // loop_pre_header
      _
    $region3: #{transformer_block.5} parent=1 // loop_header
      %s16 = sphi 0, %s20
      %p17 = scmp.ge.s32.totalorder %s16, 4
      %s23 = sphi 0, %s35
      %s24 = sphi 0, %s31
      %s25 = sphi 0, %s23
      %s26 = sphi 0, %s24
      %s27 = sphi 0, %s25
      %s28 = sphi 0, %s26
      %s38 = sphi 0, %s40
      %s41 = sphi 0, %s38
      %s42 = sphi 0, %s41
      %s58 = sphi 0, %s42
      %s62 = sphi 0, %s62
      %s64 = sphi 0, %s62
      %s65 = sphi 0, %s64
      %s79 = sphi 0, %s65
      %s83 = sphi 0, %s83
      %s85 = sphi 0, %s83
      %s86 = sphi 0, %s85
      %s100 = sphi 0, %s86
      %s106 = sphi 0, %s108
      %s109 = sphi 0, %s106
      %s110 = sphi 0, %s109
      %s126 = sphi 0, %s110
      %s132 = sphi 0, %s134
      %s135 = sphi 0, %s132
      %s136 = sphi 0, %s135
      %s152 = sphi 0, %s136
      %s158 = sphi 0, %s160
      %s161 = sphi 0, %s158
      %s162 = sphi 0, %s161
      %s178 = sphi 0, %s162
      %s182 = sphi 0, %s182
      %s184 = sphi 0, %s182
      %s185 = sphi 0, %s184
      %s199 = sphi 0, %s185
      %s205 = sphi 0, %s207
      %s208 = sphi 0, %s205
      %s209 = sphi 0, %s208
      %s225 = sphi 0, %s209
    $region4: #{transformer_block.5} parent=1 // loop_header_branch
      %19 = sbr.rel (%p17) target = $region8
    $region5: #{transformer_block.5} parent=1 // loop_body
      %s21 = ssub.s32 %s16, 1
      %s22 = ssub.s32 %s16, 2
      %s29 = sadd.s32 1, %s24
      %p30 = scmp.ge.s32.totalorder %s29, 1
      %s31 = scalar_select %p30, 0, %s29
      %s32 = sadd.s32 1, %s23
      %s33 = scalar_select %p30, %s32, %s23
      %p34 = scmp.ge.s32.totalorder %s33, 2
      %s35 = scalar_select %p34, 0, %s33
      %s36 = ssub.s32 %s23, %s35
      %p37 = scmp.eq.s32.totalorder %s36, 0
      %s39 = sadd.s32 %s38, 1
      %s40 = scalar_select %p37, %s38, %s39
      %p43 = pneg %p37
      %p44 = scmp.eq.s32.totalorder %s16, 1
      %p45 = por %p43, %p44
      %p46 = scmp.ne.s32.totalorder %s38, %s41
      %p47 = scmp.eq.s32.totalorder %s16, 0
      %p48 = por %p46, %p47
      %p49 = scmp.ne.s32.totalorder %s38, %s41
      %p50 = scmp.eq.s32.totalorder %s21, 1
      %p51 = por %p49, %p50
      %p52 = scmp.ne.s32.totalorder %s41, %s42
      %p53 = scmp.eq.s32.totalorder %s21, 0
      %p54 = por %p52, %p53
      %p55 = scmp.ne.s32.totalorder %s41, %s42
      %p56 = scmp.eq.s32.totalorder %s22, 1
      %p57 = por %p55, %p56
      %p59 = scmp.ne.s32.totalorder %s42, %s58
      %p60 = scmp.eq.s32.totalorder %s22, 0
      %p61 = por %p59, %p60
      %s63 = sadd.s32 %s62, 1
      %p66 = scmp.eq.s32.totalorder %s16, 1
      %p67 = scmp.ne.s32.totalorder %s62, %s64
      %p68 = scmp.eq.s32.totalorder %s16, 0
      %p69 = por %p67, %p68
      %p70 = scmp.ne.s32.totalorder %s62, %s64
      %p71 = scmp.eq.s32.totalorder %s21, 1
      %p72 = por %p70, %p71
      %p73 = scmp.ne.s32.totalorder %s64, %s65
      %p74 = scmp.eq.s32.totalorder %s21, 0
      %p75 = por %p73, %p74
      %p76 = scmp.ne.s32.totalorder %s64, %s65
      %p77 = scmp.eq.s32.totalorder %s22, 1
      %p78 = por %p76, %p77
      %p80 = scmp.ne.s32.totalorder %s65, %s79
      %p81 = scmp.eq.s32.totalorder %s22, 0
      %p82 = por %p80, %p81
      %s84 = sadd.s32 %s83, 1
      %p87 = scmp.eq.s32.totalorder %s16, 1
      %p88 = scmp.ne.s32.totalorder %s83, %s85
      %p89 = scmp.eq.s32.totalorder %s16, 0
      %p90 = por %p88, %p89
      %p91 = scmp.ne.s32.totalorder %s83, %s85
      %p92 = scmp.eq.s32.totalorder %s21, 1
      %p93 = por %p91, %p92
      %p94 = scmp.ne.s32.totalorder %s85, %s86
      %p95 = scmp.eq.s32.totalorder %s21, 0
      %p96 = por %p94, %p95
      %p97 = scmp.ne.s32.totalorder %s85, %s86
      %p98 = scmp.eq.s32.totalorder %s22, 1
      %p99 = por %p97, %p98
      %p101 = scmp.ne.s32.totalorder %s86, %s100
      %p102 = scmp.eq.s32.totalorder %s22, 0
      %p103 = por %p101, %p102
      %s104 = ssub.s32 %s24, %s31
      %p105 = scmp.eq.s32.totalorder %s104, 0
      %s107 = sadd.s32 %s106, 1
      %s108 = scalar_select %p105, %s106, %s107
      %p111 = pneg %p105
      %p112 = scmp.eq.s32.totalorder %s16, 1
      %p113 = por %p111, %p112
      %p114 = scmp.ne.s32.totalorder %s106, %s109
      %p115 = scmp.eq.s32.totalorder %s16, 0
      %p116 = por %p114, %p115
      %p117 = scmp.ne.s32.totalorder %s106, %s109
      %p118 = scmp.eq.s32.totalorder %s21, 1
      %p119 = por %p117, %p118
      %p120 = scmp.ne.s32.totalorder %s109, %s110
      %p121 = scmp.eq.s32.totalorder %s21, 0
      %p122 = por %p120, %p121
      %p123 = scmp.ne.s32.totalorder %s109, %s110
      %p124 = scmp.eq.s32.totalorder %s22, 1
      %p125 = por %p123, %p124
      %p127 = scmp.ne.s32.totalorder %s110, %s126
      %p128 = scmp.eq.s32.totalorder %s22, 0
      %p129 = por %p127, %p128
      %s130 = ssub.s32 %s24, %s31
      %p131 = scmp.eq.s32.totalorder %s130, 0
      %s133 = sadd.s32 %s132, 1
      %s134 = scalar_select %p131, %s132, %s133
      %p137 = pneg %p131
      %p138 = scmp.eq.s32.totalorder %s16, 1
      %p139 = por %p137, %p138
      %p140 = scmp.ne.s32.totalorder %s132, %s135
      %p141 = scmp.eq.s32.totalorder %s16, 0
      %p142 = por %p140, %p141
      %p143 = scmp.ne.s32.totalorder %s132, %s135
      %p144 = scmp.eq.s32.totalorder %s21, 1
      %p145 = por %p143, %p144
      %p146 = scmp.ne.s32.totalorder %s135, %s136
      %p147 = scmp.eq.s32.totalorder %s21, 0
      %p148 = por %p146, %p147
      %p149 = scmp.ne.s32.totalorder %s135, %s136
      %p150 = scmp.eq.s32.totalorder %s22, 1
      %p151 = por %p149, %p150
      %p153 = scmp.ne.s32.totalorder %s136, %s152
      %p154 = scmp.eq.s32.totalorder %s22, 0
      %p155 = por %p153, %p154
      %s156 = ssub.s32 %s24, %s31
      %p157 = scmp.eq.s32.totalorder %s156, 0
      %s159 = sadd.s32 %s158, 1
      %s160 = scalar_select %p157, %s158, %s159
      %p163 = pneg %p157
      %p164 = scmp.eq.s32.totalorder %s16, 1
      %p165 = por %p163, %p164
      %p166 = scmp.ne.s32.totalorder %s158, %s161
      %p167 = scmp.eq.s32.totalorder %s16, 0
      %p168 = por %p166, %p167
      %p169 = scmp.ne.s32.totalorder %s158, %s161
      %p170 = scmp.eq.s32.totalorder %s21, 1
      %p171 = por %p169, %p170
      %p172 = scmp.ne.s32.totalorder %s161, %s162
      %p173 = scmp.eq.s32.totalorder %s21, 0
      %p174 = por %p172, %p173
      %p175 = scmp.ne.s32.totalorder %s161, %s162
      %p176 = scmp.eq.s32.totalorder %s22, 1
      %p177 = por %p175, %p176
      %p179 = scmp.ne.s32.totalorder %s162, %s178
      %p180 = scmp.eq.s32.totalorder %s22, 0
      %p181 = por %p179, %p180
      %s183 = sadd.s32 %s182, 1
      %p186 = scmp.eq.s32.totalorder %s16, 1
      %p187 = scmp.ne.s32.totalorder %s182, %s184
      %p188 = scmp.eq.s32.totalorder %s16, 0
      %p189 = por %p187, %p188
      %p190 = scmp.ne.s32.totalorder %s182, %s184
      %p191 = scmp.eq.s32.totalorder %s21, 1
      %p192 = por %p190, %p191
      %p193 = scmp.ne.s32.totalorder %s184, %s185
      %p194 = scmp.eq.s32.totalorder %s21, 0
      %p195 = por %p193, %p194
      %p196 = scmp.ne.s32.totalorder %s184, %s185
      %p197 = scmp.eq.s32.totalorder %s22, 1
      %p198 = por %p196, %p197
      %p200 = scmp.ne.s32.totalorder %s185, %s199
      %p201 = scmp.eq.s32.totalorder %s22, 0
      %p202 = por %p200, %p201
      %s203 = ssub.s32 %s23, %s35
      %p204 = scmp.eq.s32.totalorder %s203, 0
      %s206 = sadd.s32 %s205, 1
      %s207 = scalar_select %p204, %s205, %s206
      %p210 = pneg %p204
      %p211 = scmp.eq.s32.totalorder %s16, 1
      %p212 = por %p210, %p211
      %p213 = scmp.ne.s32.totalorder %s205, %s208
      %p214 = scmp.eq.s32.totalorder %s16, 0
      %p215 = por %p213, %p214
      %p216 = scmp.ne.s32.totalorder %s205, %s208
      %p217 = scmp.eq.s32.totalorder %s21, 1
      %p218 = por %p216, %p217
      %p219 = scmp.ne.s32.totalorder %s208, %s209
      %p220 = scmp.eq.s32.totalorder %s21, 0
      %p221 = por %p219, %p220
      %p222 = scmp.ne.s32.totalorder %s208, %s209
      %p223 = scmp.eq.s32.totalorder %s22, 1
      %p224 = por %p222, %p223
      %p226 = scmp.ne.s32.totalorder %s209, %s225
      %p227 = scmp.eq.s32.totalorder %s22, 0
      %p228 = por %p226, %p227
      %p229 = scmp.le.s32.totalorder 1, %s16
      %p230 = scmp.lt.s32.totalorder %s16, 3
      %p231 = pnand %p229, %p230
      %p232 = pneg %p231
      // Predicated region
      $region9: #{transformer_block.5} parent=5 // pred_check
        _
      $region10: #{transformer_block.5} parent=5 // pred_check_branch
        %234 = sbr.rel (%p231) target = $region12
      $region11: #{transformer_block.5} parent=5 // pred_region
        %s235 = ssub.s32 %s16, 1
        // Predicated region
        $region13: #{transformer_block.5} parent=11 // pred_check
          %p236 = pneg %p75
        $region14: #{transformer_block.5} parent=11 // pred_check_branch
          %238 = sbr.rel (%p236) target = $region16
        $region15: #{transformer_block.5} parent=11 // pred_region
          _
        $region16: #{transformer_block.5} parent=11 // pred_fallthru
          _
        // Predicated region
        $region17: #{transformer_block.5} parent=11 // pred_check
          %p239 = pneg %p96
        $region18: #{transformer_block.5} parent=11 // pred_check_branch
          %241 = sbr.rel (%p239) target = $region20
        $region19: #{transformer_block.5} parent=11 // pred_region
          _
        $region20: #{transformer_block.5} parent=11 // pred_fallthru
          _
        // Predicated region
        $region21: #{transformer_block.5} parent=11 // pred_check
          %p242 = pneg %p122
        $region22: #{transformer_block.5} parent=11 // pred_check_branch
          %244 = sbr.rel (%p242) target = $region24
        $region23: #{transformer_block.5} parent=11 // pred_region
          %p245 = scmp.lt.s32.totalorder %s26, 0
          %s246 = scalar_select %p245, %s26, 0
          %s247 = smul.addr %s246, 4
          %s248 = scalar_lea.vmem %s3, %s247
        $region24: #{transformer_block.5} parent=11 // pred_fallthru
          _
        // Predicated region
        $region25: #{transformer_block.5} parent=11 // pred_check
          %p249 = pneg %p148
        $region26: #{transformer_block.5} parent=11 // pred_check_branch
          %251 = sbr.rel (%p249) target = $region28
        $region27: #{transformer_block.5} parent=11 // pred_region
          %p252 = scmp.lt.s32.totalorder %s26, 0
          %s253 = scalar_select %p252, %s26, 0
          %s254 = scalar_lea.vmem %s4, %s253
        $region28: #{transformer_block.5} parent=11 // pred_fallthru
          _
        // Predicated region
        $region29: #{transformer_block.5} parent=11 // pred_check
          %p255 = pneg %p174
        $region30: #{transformer_block.5} parent=11 // pred_check_branch
          %257 = sbr.rel (%p255) target = $region32
        $region31: #{transformer_block.5} parent=11 // pred_region
          %s258 = smul.u32 16, %s26
          %p259 = scmp.lt.s32.totalorder %s258, 15
          %s260 = scalar_select %p259, %s258, 15
          %s261 = smul.addr %s260, 4
          %s262 = scalar_lea.vmem %s5, %s261
          %s263 = smul.u32 16, %s26
        $region32: #{transformer_block.5} parent=11 // pred_fallthru
          _
        // Predicated region
        $region33: #{transformer_block.5} parent=11 // pred_check
          %p264 = pneg %p195
        $region34: #{transformer_block.5} parent=11 // pred_check_branch
          %266 = sbr.rel (%p264) target = $region36
        $region35: #{transformer_block.5} parent=11 // pred_region
          _
        $region36: #{transformer_block.5} parent=11 // pred_fallthru
          _
      $region12: #{transformer_block.5} parent=5 // pred_fallthru
        _
      %p267 = scmp.lt.s32.totalorder %s16, 2
      // Predicated region
      $region37: #{transformer_block.5} parent=5 // pred_check
        %p268 = pneg %p267
      $region38: #{transformer_block.5} parent=5 // pred_check_branch
        %270 = sbr.rel (%p268) target = $region40
      $region39: #{transformer_block.5} parent=5 // pred_region
        // Predicated region
        $region41: #{transformer_block.5} parent=39 // pred_check
          %p271 = pneg %p48
        $region42: #{transformer_block.5} parent=39 // pred_check_branch
          %273 = sbr.rel (%p271) target = $region44
        $region43: #{transformer_block.5} parent=39 // pred_region
          %p274 = scmp.lt.s32.totalorder %s23, 1
          %s275 = scalar_select %p274, %s23, 1
          %s276 = smul.addr %s275, 8
          %s277 = scalar_lea.vmem %s0, %s276
        $region44: #{transformer_block.5} parent=39 // pred_fallthru
          _
      $region40: #{transformer_block.5} parent=5 // pred_fallthru
        _
      %p278 = scmp.le.s32.totalorder 1, %s16
      %p279 = scmp.lt.s32.totalorder %s16, 3
      %p280 = pnand %p278, %p279
      %p281 = pneg %p280
      // Predicated region
      $region45: #{transformer_block.5} parent=5 // pred_check
        _
      $region46: #{transformer_block.5} parent=5 // pred_check_branch
        %283 = sbr.rel (%p280) target = $region48
      $region47: #{transformer_block.5} parent=5 // pred_region
        %s284 = ssub.s32 %s16, 1
        %p285 = scmp.lt.s32.totalorder %s25, 1
        %s286 = scalar_select %p285, %s25, 1
        %s287 = smul.addr %s286, 8
        %s288 = scalar_lea.vmem %s0, %s287
        %p289 = pneg %p54
        %p290 = pneg %p51
        %p291 = pneg %p75
        %p292 = pneg %p72
        %p293 = pneg %p96
        %p294 = pneg %p93
        %p295 = scmp.lt.s32.totalorder %s26, 0
        %s296 = scalar_select %p295, %s26, 0
        %s297 = smul.addr %s296, 4
        %s298 = scalar_lea.vmem %s3, %s297
        %p299 = pneg %p122
        %p300 = pneg %p119
        %p301 = scmp.lt.s32.totalorder %s26, 0
        %s302 = scalar_select %p301, %s26, 0
        %s303 = scalar_lea.vmem %s4, %s302
        %p304 = pneg %p148
        %p305 = pneg %p145
        %s306 = smul.u32 16, %s26
        %p307 = scmp.lt.s32.totalorder %s306, 15
        %s308 = scalar_select %p307, %s306, 15
        %s309 = smul.addr %s308, 4
        %s310 = scalar_lea.vmem %s5, %s309
        %p311 = pneg %p174
        %p312 = pneg %p171
        %p313 = pneg %p195
        %p314 = pneg %p192
        %p315 = pneg %p221
        %p316 = pneg %p218
        %s317 = sand.u32 %s208, 1
        %s318 = scalar_lea.sflag [#allocation5], %s317
        %s319 = sand.u32 %s208, 1
        %s320 = smul.addr %s319, 8
        %s321 = scalar_lea.vmem [#allocation4], %s320
        %p322 = scmp.lt.s32.totalorder %s25, 1
        %s323 = scalar_select %p322, %s25, 1
        %s324 = smul.addr %s323, 8
        %s325 = scalar_lea.vmem %s0, %s324
        %p326 = scmp.lt.s32.totalorder %s26, 0
        %s327 = scalar_select %p326, %s26, 0
        %s328 = smul.addr %s327, 4
        %s329 = scalar_lea.vmem %s3, %s328
        %p330 = scmp.lt.s32.totalorder %s26, 0
        %s331 = scalar_select %p330, %s26, 0
        %s332 = scalar_lea.vmem %s4, %s331
        %s333 = smul.u32 16, %s26
        %p334 = scmp.lt.s32.totalorder %s333, 15
        %s335 = scalar_select %p334, %s333, 15
        %s336 = smul.addr %s335, 4
        %s337 = scalar_lea.vmem %s5, %s336
        %s338 = smul.u32 16, %s26
        %p340 = scmp.eq.s32.totalorder %s26, 0
        // Predicated region
        $region49: #{transformer_block.5} parent=47 // pred_check
          %p341 = pneg %p340
        $region50: #{transformer_block.5} parent=47 // pred_check_branch
          %343 = sbr.rel (%p341) target = $region52
        $region51: #{transformer_block.5} parent=47 // pred_region
          %vm344 = vcmask 261120
          %345 = vst.msk [vmem:[#allocation2] sm:$0xff] %vm344, 0.0
          %v346 = vld [vmem:[%s325] sm:$0xff]
          %v347 = vld [vmem:[%s1] sm:$0x1]
          %v348 = vld [vmem:[%s2] sm:$0x1]
          %v349 = vsel %vm344, %v346, 0.0
          %350 = vadd.xlane.f32.xlu0 %v349
          %v351 = vpop.xlane.xlu0 %350
          %v352 = vrcp.pop 32.0
          %v353 = vmul.f32 32.0, %v352
          %v354 = vsub.f32 1.0, %v353
          %v355 = vmul.f32 %v352, %v354
          %v356 = vadd.f32 %v352, %v355
          %vm357 = vweird.f32 %v352
          %v358 = vsel %vm357, %v352, %v356
          %v359 = vmul.f32 %v351, %v358
          %v360 = vsub.f32 %v346, %v359
          %v361 = vmul.f32 %v360, %v360
          %v362 = vsel %vm344, %v361, 0.0
          %363 = vadd.xlane.f32.xlu0 %v362
          %v364 = vpop.xlane.xlu0 %363
          %v365 = vmul.f32 %v364, %v358
          %v366 = vadd.f32 %v365, 1e-05
          %v367 = vrsqrt.pop %v366
          %v368 = vmul.f32 %v367, %v366
          %v369 = vmul.f32 %v368, %v367
          %v370 = vmul.f32 0.5, %v369
          %v371 = vsub.f32 1.5, %v370
          %v372 = vmul.f32 %v367, %v371
          %vm373 = vweird.f32 %v366
          %vm374 = vweird.f32 %v367
          %vm375 = vmor %vm373, %vm374
          %v376 = vsel %vm375, %v367, %v372
          %v377 = vmul.f32 %v360, %v376
          %v379 = vperm.slane %v347, 0
          %v381 = vmul.f32 %v377, %v379
          %v383 = vperm.slane %v348, 0
          %v385 = vadd.f32 %v381, %v383
          %v386 = vpack.c.bf16 %v385, %v385
          %vm387 = vcmask 257024
          %388 = vst.msk [vmem:[#allocation3] sm:$0xf] %vm387, %v386
        $region52: #{transformer_block.5} parent=47 // pred_fallthru
          _
        %v389 = vld [vmem:[#allocation3] sm:$0xf]
        %v390 = vld [vmem:[%s329] sm:$0xf]
        %v391 = vld [vmem:[%s329 + $0x4] sm:$0xf]
        %v392 = vld [vmem:[%s329 + $0x8] sm:$0xf]
        %v393 = vld [vmem:[%s329 + $0xc] sm:$0xf]
        %v394 = vld [vmem:[%s332] sm:$0x1]
        %v396 = vperm.slane %v394, 0
        %v402 = vunpack.c.l.b16 %v390
        %v403 = vunpack.c.l.b16 %v391
        %v404 = vunpack.c.l.b16 %v392
        %v405 = vunpack.c.l.b16 %v393
        %v406 = vpack.c.b16 %v403, %v402
        %v407 = vpack.c.b16 %v405, %v404
        %vm410 = vcmask 261120
        %v412 = vsel %vm410, %v389, 0
        %414 = vmatpush.bf16.msra.mxu0 0
        %415 = vmatpush.bf16.msra.mxu0 0
        %416 = vmatpush.bf16.msra.mxu0 0
        %417 = vmatpush.bf16.msra.mxu0 0
        %418 = vmatpush.bf16.msra.mxu0 0
        %419 = vmatpush.bf16.msra.mxu0 0
        %420 = vmatpush.bf16.msra.mxu0 %v407
        %421 = vmatpush.bf16.msra.mxu0 %v406
        %422 = vmatmul.bf16.gmra.mxu0 %v412
        %v423 = vpop.f32.mrf.mxu0
        %v424 = vadd.f32 %v396, %v423
        %v425 = vpop.f32.mrf.mxu0
        %426 = vdwg.mxu0
        %v427 = vmul.f32 %v424, %v424
        %v428 = vmul.f32 %v424, %v427
        %v429 = vmul.f32 %v428, 0.044715
        %v430 = vadd.f32 %v424, %v429
        %v431 = vmul.f32 %v430, 0.7978846
        %v432 = vtanh.pop %v431
        %v433 = vadd.f32 %v432, 1.0
        %v434 = vmul.f32 %v433, 0.5
        %v435 = vmul.f32 %v424, %v434
        %v436 = vld [vmem:[#allocation2] sm:$0xff]
        %v437 = vpack.c.bf16 %v435, %v435
        %v438 = vld [vmem:[%s337] sm:$0xf]
        %v439 = vld [vmem:[%s337 + $0x4] sm:$0xf]
        %v440 = vld [vmem:[%s337 + $0x8] sm:$0xf]
        %v441 = vld [vmem:[%s337 + $0xc] sm:$0xf]
        %v442 = vld [vmem:[%s337 + $0x10] sm:$0xf]
        %v443 = vld [vmem:[%s337 + $0x14] sm:$0xf]
        %v444 = vld [vmem:[%s337 + $0x18] sm:$0xf]
        %v445 = vld [vmem:[%s337 + $0x1c] sm:$0xf]
        %v446 = vld [vmem:[%s337 + $0x20] sm:$0xf]
        %v447 = vld [vmem:[%s337 + $0x24] sm:$0xf]
        %v448 = vld [vmem:[%s337 + $0x28] sm:$0xf]
        %v449 = vld [vmem:[%s337 + $0x2c] sm:$0xf]
        %v450 = vld [vmem:[%s337 + $0x30] sm:$0xf]
        %v451 = vld [vmem:[%s337 + $0x34] sm:$0xf]
        %v452 = vld [vmem:[%s337 + $0x38] sm:$0xf]
        %v453 = vld [vmem:[%s337 + $0x3c] sm:$0xf]
        %v470 = vunpack.c.l.b16 %v438
        %v471 = vunpack.c.l.b16 %v439
        %v472 = vunpack.c.l.b16 %v440
        %v473 = vunpack.c.l.b16 %v441
        %v474 = vunpack.c.l.b16 %v442
        %v475 = vunpack.c.l.b16 %v443
        %v476 = vunpack.c.l.b16 %v444
        %v477 = vunpack.c.l.b16 %v445
        %v478 = vunpack.c.l.b16 %v446
        %v479 = vunpack.c.l.b16 %v447
        %v480 = vunpack.c.l.b16 %v448
        %v481 = vunpack.c.l.b16 %v449
        %v482 = vunpack.c.l.b16 %v450
        %v483 = vunpack.c.l.b16 %v451
        %v484 = vunpack.c.l.b16 %v452
        %v485 = vunpack.c.l.b16 %v453
        %v486 = vpack.c.b16 %v471, %v470
        %v487 = vpack.c.b16 %v473, %v472
        %v488 = vpack.c.b16 %v475, %v474
        %v489 = vpack.c.b16 %v477, %v476
        %v490 = vpack.c.b16 %v479, %v478
        %v491 = vpack.c.b16 %v481, %v480
        %v492 = vpack.c.b16 %v483, %v482
        %v493 = vpack.c.b16 %v485, %v484
        %502 = vmatpush.bf16.msra.mxu0 %v493
        %503 = vmatpush.bf16.msra.mxu0 %v492
        %504 = vmatpush.bf16.msra.mxu0 %v491
        %505 = vmatpush.bf16.msra.mxu0 %v490
        %506 = vmatpush.bf16.msra.mxu0 %v489
        %507 = vmatpush.bf16.msra.mxu0 %v488
        %508 = vmatpush.bf16.msra.mxu0 %v487
        %509 = vmatpush.bf16.msra.mxu0 %v486
        %510 = vmatmul.bf16.gmra.mxu0 %v437
        %v511 = vpop.f32.mrf.mxu0
        %v512 = vadd.f32 0.0, %v511
        %v513 = vpop.f32.mrf.mxu0
        %514 = vdwg.mxu0
        %v515 = vadd.f32 %v436, %v512
        %516 = vst.msk [vmem:[#allocation2] sm:$0xff] %vm410, %v515
        // Predicated region
        $region53: #{transformer_block.5} parent=47 // pred_check
          %p517 = pneg %p340
        $region54: #{transformer_block.5} parent=47 // pred_check_branch
          %519 = sbr.rel (%p517) target = $region56
        $region55: #{transformer_block.5} parent=47 // pred_region
          %v520 = vld [vmem:[#allocation2] sm:$0xff]
          %v521 = vld [vmem:[%s6] sm:$0x1]
          %v523 = vperm.slane %v521, 0
          %v525 = vadd.f32 %v520, %v523
          %v526 = vld [vmem:[%s325] sm:$0xff]
          %v527 = vadd.f32 %v525, %v526
          %528 = vst.msk [vmem:[%s321] sm:$0xff] %vm410, %v527
        $region56: #{transformer_block.5} parent=47 // pred_fallthru
          _
        %s529 = sand.u32 %s208, 1
        %s530 = scalar_lea.sflag [#allocation5], %s529
        %s531 = sand.u32 %s208, 1
        %s532 = smul.addr %s531, 8
        %s533 = scalar_lea.vmem [#allocation4], %s532
        // Predicated region
        $region57: #{transformer_block.5} parent=47 // pred_check
          %p534 = pneg %p218
        $region58: #{transformer_block.5} parent=47 // pred_check_branch
          %536 = sbr.rel (%p534) target = $region60
        $region59: #{transformer_block.5} parent=47 // pred_region
          %538 = vsyncadd %s530, 0
          %s539 = smul.addr %s25, 8
          %s540 = scalar_lea.hbm %s7, %s539
          %s542 = sshll.u32 %s533, 4
          %s543 = int_to_ptr.vmem [resolvable:$true] %s542
          %s544 = sshll.u32 %s540, 4
          %s545 = int_to_ptr.hbm [resolvable:$true] %s544
          %547 = dma.vmem_to_hbm [thread:$0]  %s543, 128, %s545, %s530
        $region60: #{transformer_block.5} parent=47 // pred_fallthru
          _
      $region48: #{transformer_block.5} parent=5 // pred_fallthru
        _
      %p548 = scmp.le.s32.totalorder 2, %s16
      // Predicated region
      $region61: #{transformer_block.5} parent=5 // pred_check
        %p549 = pneg %p548
      $region62: #{transformer_block.5} parent=5 // pred_check_branch
        %551 = sbr.rel (%p549) target = $region64
      $region63: #{transformer_block.5} parent=5 // pred_region
        %s552 = ssub.s32 %s16, 2
        // Predicated region
        $region65: #{transformer_block.5} parent=63 // pred_check
          %p553 = pneg %p224
        $region66: #{transformer_block.5} parent=63 // pred_check_branch
          %555 = sbr.rel (%p553) target = $region68
        $region67: #{transformer_block.5} parent=63 // pred_region
          %s556 = sand.u32 %s209, 1
          %s557 = scalar_lea.sflag [#allocation5], %s556
          %s558 = sand.u32 %s209, 1
          %s559 = smul.addr %s558, 8
          %s560 = scalar_lea.vmem [#allocation4], %s559
          %562 = dma.done %s557, 128
        $region68: #{transformer_block.5} parent=63 // pred_fallthru
          _
      $region64: #{transformer_block.5} parent=5 // pred_fallthru
        _
    $region6: #{transformer_block.5} parent=1 // loop_footer
      %s20 = sadd.s32 1, %s16
    $region7: #{transformer_block.5} parent=1 // loop_footer_branch
      %15 = sbr.rel target = $region3
    $region8: #{transformer_block.5} parent=1 // loop_exit
      _
    %563 = vsyncpa [#allocation5], 1
    %s564 = scalar_lea.sflag [#allocation5], 1
    %565 = vsyncpa %s564, 1

// kernel: transformer_block.3
$region0: #{transformer_block.3}
  #allocation0 [shape = 'u32[]', space=smem, size = 0x4, offset = 0x4, fixed_abs, tag = 'smem constant byte address 0x4 - core index']
  #allocation1 [shape = 'u32[72,128]{1,0:T(1,128)}', space=vmem, size = 0x9000, scoped, tag = 'internal scratch']
  #allocation2 [shape = 'bf16[8,32]{1,0:T(8,128)(2,1)}', space=vmem, size = 0x800, scoped, tag = 'scratch operand']
  %s0 = inlined_call_operand.hbm [shape: f32[16,32], index: 0, kind: input, shape index: {}]
  %s1 = inlined_call_operand.vmem [shape: f32[1,32], index: 1, kind: input, shape index: {}]
  %s2 = inlined_call_operand.vmem [shape: f32[1,32], index: 2, kind: input, shape index: {}]
  %s3 = inlined_call_operand.hbm [shape: bf16[32,96], index: 3, kind: input, shape index: {}]
  %s4 = inlined_call_operand.vmem [shape: f32[1,96], index: 4, kind: input, shape index: {}]
  %s5 = inlined_call_operand.vmem [shape: bf16[16,96], index: 5, kind: output, shape index: {}]
  %s6 = sld [smem:[#allocation0]]
  $region65: #{transformer_block.3} parent=0
    _
  %s8 = ssub.s32 1, %s6
  %s9 = scalar_select 0, %s8, %s6
  $region1: #{transformer_block.3} parent=0
    #allocation3 [shape = 'u8[8192]{0}', space=vmem, size = 0x2000, scoped, tag = 'input window, operand 0']
    #allocation4 [shape = 's32[2]{0}', space=sflag, size = 0x8, scoped, tag = 'scoped memory for transformer_block.3']
    #allocation5 [shape = 'u8[8192]{0}', space=vmem, size = 0x2000, scoped, tag = 'input window, operand 3, single buffered']
    #allocation6 [shape = 's32[1]{0}', space=sflag, size = 0x4, scoped, tag = 'scoped memory for transformer_block.3']
    %10 = vsyncpa [#allocation4], 0
    %s11 = scalar_lea.sflag [#allocation4], 1
    %12 = vsyncpa %s11, 0
    %13 = vsyncpa [#allocation6], 0
    loop: start=0, step=1, limit=4
    $region2: #{transformer_block.3} parent=1 // loop_pre_header
      _
    $region3: #{transformer_block.3} parent=1 // loop_header
      %s15 = sphi 0, %s19
      %p16 = scmp.ge.s32.totalorder %s15, 4
      %s22 = sphi 0, %s34
      %s23 = sphi 0, %s30
      %s24 = sphi 0, %s22
      %s25 = sphi 0, %s23
      %s26 = sphi 0, %s24
      %s27 = sphi 0, %s25
      %s37 = sphi 0, %s39
      %s40 = sphi 0, %s37
      %s41 = sphi 0, %s40
      %s57 = sphi 0, %s41
      %s61 = sphi 0, %s61
      %s63 = sphi 0, %s61
      %s64 = sphi 0, %s63
      %s78 = sphi 0, %s64
      %s82 = sphi 0, %s82
      %s84 = sphi 0, %s82
      %s85 = sphi 0, %s84
      %s99 = sphi 0, %s85
      %s105 = sphi 0, %s107
      %s108 = sphi 0, %s105
      %s109 = sphi 0, %s108
      %s125 = sphi 0, %s109
      %s131 = sphi 0, %s133
      %s134 = sphi 0, %s131
      %s135 = sphi 0, %s134
      %s151 = sphi 0, %s135
      %s159 = sphi 0, %s161
      %s162 = sphi 0, %s159
      %s163 = sphi 0, %s162
      %s179 = sphi 0, %s163
    $region4: #{transformer_block.3} parent=1 // loop_header_branch
      %18 = sbr.rel (%p16) target = $region8
    $region5: #{transformer_block.3} parent=1 // loop_body
      %s20 = ssub.s32 %s15, 1
      %s21 = ssub.s32 %s15, 2
      %s28 = sadd.s32 1, %s23
      %p29 = scmp.ge.s32.totalorder %s28, 1
      %s30 = scalar_select %p29, 0, %s28
      %s31 = sadd.s32 1, %s22
      %s32 = scalar_select %p29, %s31, %s22
      %p33 = scmp.ge.s32.totalorder %s32, 2
      %s34 = scalar_select %p33, 0, %s32
      %s35 = ssub.s32 %s22, %s34
      %p36 = scmp.eq.s32.totalorder %s35, 0
      %s38 = sadd.s32 %s37, 1
      %s39 = scalar_select %p36, %s37, %s38
      %p42 = pneg %p36
      %p43 = scmp.eq.s32.totalorder %s15, 1
      %p44 = por %p42, %p43
      %p45 = scmp.ne.s32.totalorder %s37, %s40
      %p46 = scmp.eq.s32.totalorder %s15, 0
      %p47 = por %p45, %p46
      %p48 = scmp.ne.s32.totalorder %s37, %s40
      %p49 = scmp.eq.s32.totalorder %s20, 1
      %p50 = por %p48, %p49
      %p51 = scmp.ne.s32.totalorder %s40, %s41
      %p52 = scmp.eq.s32.totalorder %s20, 0
      %p53 = por %p51, %p52
      %p54 = scmp.ne.s32.totalorder %s40, %s41
      %p55 = scmp.eq.s32.totalorder %s21, 1
      %p56 = por %p54, %p55
      %p58 = scmp.ne.s32.totalorder %s41, %s57
      %p59 = scmp.eq.s32.totalorder %s21, 0
      %p60 = por %p58, %p59
      %s62 = sadd.s32 %s61, 1
      %p65 = scmp.eq.s32.totalorder %s15, 1
      %p66 = scmp.ne.s32.totalorder %s61, %s63
      %p67 = scmp.eq.s32.totalorder %s15, 0
      %p68 = por %p66, %p67
      %p69 = scmp.ne.s32.totalorder %s61, %s63
      %p70 = scmp.eq.s32.totalorder %s20, 1
      %p71 = por %p69, %p70
      %p72 = scmp.ne.s32.totalorder %s63, %s64
      %p73 = scmp.eq.s32.totalorder %s20, 0
      %p74 = por %p72, %p73
      %p75 = scmp.ne.s32.totalorder %s63, %s64
      %p76 = scmp.eq.s32.totalorder %s21, 1
      %p77 = por %p75, %p76
      %p79 = scmp.ne.s32.totalorder %s64, %s78
      %p80 = scmp.eq.s32.totalorder %s21, 0
      %p81 = por %p79, %p80
      %s83 = sadd.s32 %s82, 1
      %p86 = scmp.eq.s32.totalorder %s15, 1
      %p87 = scmp.ne.s32.totalorder %s82, %s84
      %p88 = scmp.eq.s32.totalorder %s15, 0
      %p89 = por %p87, %p88
      %p90 = scmp.ne.s32.totalorder %s82, %s84
      %p91 = scmp.eq.s32.totalorder %s20, 1
      %p92 = por %p90, %p91
      %p93 = scmp.ne.s32.totalorder %s84, %s85
      %p94 = scmp.eq.s32.totalorder %s20, 0
      %p95 = por %p93, %p94
      %p96 = scmp.ne.s32.totalorder %s84, %s85
      %p97 = scmp.eq.s32.totalorder %s21, 1
      %p98 = por %p96, %p97
      %p100 = scmp.ne.s32.totalorder %s85, %s99
      %p101 = scmp.eq.s32.totalorder %s21, 0
      %p102 = por %p100, %p101
      %s103 = ssub.s32 %s23, %s30
      %p104 = scmp.eq.s32.totalorder %s103, 0
      %s106 = sadd.s32 %s105, 1
      %s107 = scalar_select %p104, %s105, %s106
      %p110 = pneg %p104
      %p111 = scmp.eq.s32.totalorder %s15, 1
      %p112 = por %p110, %p111
      %p113 = scmp.ne.s32.totalorder %s105, %s108
      %p114 = scmp.eq.s32.totalorder %s15, 0
      %p115 = por %p113, %p114
      %p116 = scmp.ne.s32.totalorder %s105, %s108
      %p117 = scmp.eq.s32.totalorder %s20, 1
      %p118 = por %p116, %p117
      %p119 = scmp.ne.s32.totalorder %s108, %s109
      %p120 = scmp.eq.s32.totalorder %s20, 0
      %p121 = por %p119, %p120
      %p122 = scmp.ne.s32.totalorder %s108, %s109
      %p123 = scmp.eq.s32.totalorder %s21, 1
      %p124 = por %p122, %p123
      %p126 = scmp.ne.s32.totalorder %s109, %s125
      %p127 = scmp.eq.s32.totalorder %s21, 0
      %p128 = por %p126, %p127
      %s129 = ssub.s32 %s23, %s30
      %p130 = scmp.eq.s32.totalorder %s129, 0
      %s132 = sadd.s32 %s131, 1
      %s133 = scalar_select %p130, %s131, %s132
      %p136 = pneg %p130
      %p137 = scmp.eq.s32.totalorder %s15, 1
      %p138 = por %p136, %p137
      %p139 = scmp.ne.s32.totalorder %s131, %s134
      %p140 = scmp.eq.s32.totalorder %s15, 0
      %p141 = por %p139, %p140
      %p142 = scmp.ne.s32.totalorder %s131, %s134
      %p143 = scmp.eq.s32.totalorder %s20, 1
      %p144 = por %p142, %p143
      %p145 = scmp.ne.s32.totalorder %s134, %s135
      %p146 = scmp.eq.s32.totalorder %s20, 0
      %p147 = por %p145, %p146
      %p148 = scmp.ne.s32.totalorder %s134, %s135
      %p149 = scmp.eq.s32.totalorder %s21, 1
      %p150 = por %p148, %p149
      %p152 = scmp.ne.s32.totalorder %s135, %s151
      %p153 = scmp.eq.s32.totalorder %s21, 0
      %p154 = por %p152, %p153
      %s155 = ssub.s32 %s22, %s34
      %s156 = ssub.s32 %s23, %s30
      %s157 = sor.u32 %s155, %s156
      %p158 = scmp.eq.s32.totalorder %s157, 0
      %s160 = sadd.s32 %s159, 1
      %s161 = scalar_select %p158, %s159, %s160
      %p164 = pneg %p158
      %p165 = scmp.eq.s32.totalorder %s15, 1
      %p166 = por %p164, %p165
      %p167 = scmp.ne.s32.totalorder %s159, %s162
      %p168 = scmp.eq.s32.totalorder %s15, 0
      %p169 = por %p167, %p168
      %p170 = scmp.ne.s32.totalorder %s159, %s162
      %p171 = scmp.eq.s32.totalorder %s20, 1
      %p172 = por %p170, %p171
      %p173 = scmp.ne.s32.totalorder %s162, %s163
      %p174 = scmp.eq.s32.totalorder %s20, 0
      %p175 = por %p173, %p174
      %p176 = scmp.ne.s32.totalorder %s162, %s163
      %p177 = scmp.eq.s32.totalorder %s21, 1
      %p178 = por %p176, %p177
      %p180 = scmp.ne.s32.totalorder %s163, %s179
      %p181 = scmp.eq.s32.totalorder %s21, 0
      %p182 = por %p180, %p181
      %p183 = scmp.le.s32.totalorder 1, %s15
      %p184 = scmp.lt.s32.totalorder %s15, 3
      %p185 = pnand %p183, %p184
      %p186 = pneg %p185
      // Predicated region
      $region9: #{transformer_block.3} parent=5 // pred_check
        _
      $region10: #{transformer_block.3} parent=5 // pred_check_branch
        %188 = sbr.rel (%p185) target = $region12
      $region11: #{transformer_block.3} parent=5 // pred_region
        %s189 = ssub.s32 %s15, 1
        // Predicated region
        $region13: #{transformer_block.3} parent=11 // pred_check
          %p190 = pneg %p74
        $region14: #{transformer_block.3} parent=11 // pred_check_branch
          %192 = sbr.rel (%p190) target = $region16
        $region15: #{transformer_block.3} parent=11 // pred_region
          _
        $region16: #{transformer_block.3} parent=11 // pred_fallthru
          _
        // Predicated region
        $region17: #{transformer_block.3} parent=11 // pred_check
          %p193 = pneg %p95
        $region18: #{transformer_block.3} parent=11 // pred_check_branch
          %195 = sbr.rel (%p193) target = $region20
        $region19: #{transformer_block.3} parent=11 // pred_region
          _
        $region20: #{transformer_block.3} parent=11 // pred_fallthru
          _
        // Predicated region
        $region21: #{transformer_block.3} parent=11 // pred_check
          %p196 = pneg %p121
        $region22: #{transformer_block.3} parent=11 // pred_check_branch
          %198 = sbr.rel (%p196) target = $region24
        $region23: #{transformer_block.3} parent=11 // pred_region
          %200 = vsyncadd [#allocation6], 0
          %s201 = smul.addr %s25, 4
          %s202 = scalar_lea.hbm %s3, %s201
          %s203 = sshll.u32 %s202, 4
          %s204 = int_to_ptr.hbm [resolvable:$true] %s203
          %s205 = sshll.u32 [#allocation5], 4
          %s206 = int_to_ptr.vmem [resolvable:$true] %s205
          %211 = dma.hbm_to_vmem [thread:$0]  %s204, 256, %s206, [#allocation6], 64, 64, 4
        $region24: #{transformer_block.3} parent=11 // pred_fallthru
          _
        // Predicated region
        $region25: #{transformer_block.3} parent=11 // pred_check
          %p212 = pneg %p147
        $region26: #{transformer_block.3} parent=11 // pred_check_branch
          %214 = sbr.rel (%p212) target = $region28
        $region27: #{transformer_block.3} parent=11 // pred_region
          %p215 = scmp.lt.s32.totalorder %s25, 0
          %s216 = scalar_select %p215, %s25, 0
          %s217 = scalar_lea.vmem %s4, %s216
        $region28: #{transformer_block.3} parent=11 // pred_fallthru
          _
      $region12: #{transformer_block.3} parent=5 // pred_fallthru
        _
      %p218 = scmp.lt.s32.totalorder %s15, 2
      // Predicated region
      $region29: #{transformer_block.3} parent=5 // pred_check
        %p219 = pneg %p218
      $region30: #{transformer_block.3} parent=5 // pred_check_branch
        %221 = sbr.rel (%p219) target = $region32
      $region31: #{transformer_block.3} parent=5 // pred_region
        // Predicated region
        $region33: #{transformer_block.3} parent=31 // pred_check
          %p222 = pneg %p47
        $region34: #{transformer_block.3} parent=31 // pred_check_branch
          %224 = sbr.rel (%p222) target = $region36
        $region35: #{transformer_block.3} parent=31 // pred_region
          %s225 = sand.u32 %s37, 1
          %s226 = scalar_lea.sflag [#allocation4], %s225
          %s227 = sand.u32 %s37, 1
          %s228 = smul.addr %s227, 8
          %s229 = scalar_lea.vmem [#allocation3], %s228
          %231 = vsyncadd %s226, 0
          %s232 = smul.addr %s22, 8
          %s233 = scalar_lea.hbm %s0, %s232
          %s235 = sshll.u32 %s233, 4
          %s236 = int_to_ptr.hbm [resolvable:$true] %s235
          %s237 = sshll.u32 %s229, 4
          %s238 = int_to_ptr.vmem [resolvable:$true] %s237
          %240 = dma.hbm_to_vmem [thread:$0]  %s236, 128, %s238, %s226
        $region36: #{transformer_block.3} parent=31 // pred_fallthru
          _
      $region32: #{transformer_block.3} parent=5 // pred_fallthru
        _
      %p241 = scmp.le.s32.totalorder 1, %s15
      %p242 = scmp.lt.s32.totalorder %s15, 3
      %p243 = pnand %p241, %p242
      %p244 = pneg %p243
      // Predicated region
      $region37: #{transformer_block.3} parent=5 // pred_check
        _
      $region38: #{transformer_block.3} parent=5 // pred_check_branch
        %246 = sbr.rel (%p243) target = $region40
      $region39: #{transformer_block.3} parent=5 // pred_region
        %s247 = ssub.s32 %s15, 1
        %s248 = sand.u32 %s40, 1
        %s249 = scalar_lea.sflag [#allocation4], %s248
        %s250 = sand.u32 %s40, 1
        %s251 = smul.addr %s250, 8
        %s252 = scalar_lea.vmem [#allocation3], %s251
        // Predicated region
        $region41: #{transformer_block.3} parent=39 // pred_check
          %p253 = pneg %p53
        $region42: #{transformer_block.3} parent=39 // pred_check_branch
          %255 = sbr.rel (%p253) target = $region44
        $region43: #{transformer_block.3} parent=39 // pred_region
          %257 = dma.done %s249, 128
        $region44: #{transformer_block.3} parent=39 // pred_fallthru
          _
        // Predicated region
        $region45: #{transformer_block.3} parent=39 // pred_check
          %p258 = pneg %p121
        $region46: #{transformer_block.3} parent=39 // pred_check_branch
          %260 = sbr.rel (%p258) target = $region48
        $region47: #{transformer_block.3} parent=39 // pred_region
          %262 = dma.done [#allocation6], 256
        $region48: #{transformer_block.3} parent=39 // pred_fallthru
          _
        %s263 = sand.u32 %s40, 1
        %s264 = scalar_lea.sflag [#allocation4], %s263
        %s265 = sand.u32 %s40, 1
        %s266 = smul.addr %s265, 8
        %s267 = scalar_lea.vmem [#allocation3], %s266
        %p268 = pneg %p53
        %p269 = pneg %p50
        %p270 = pneg %p74
        %p271 = pneg %p71
        %p272 = pneg %p95
        %p273 = pneg %p92
        %p274 = pneg %p121
        %p275 = pneg %p118
        %p276 = scmp.lt.s32.totalorder %s25, 0
        %s277 = scalar_select %p276, %s25, 0
        %s278 = scalar_lea.vmem %s4, %s277
        %p279 = pneg %p147
        %p280 = pneg %p144
        %p281 = pneg %p175
        %p282 = pneg %p172
        %p283 = scmp.lt.s32.totalorder %s24, 1
        %s284 = scalar_select %p283, %s24, 1
        %p285 = scmp.lt.s32.totalorder %s25, 0
        %s286 = scalar_select %p285, %s25, 0
        %s287 = sadd.s32 %s286, %s284
        %s288 = smul.addr %s287, 4
        %s289 = scalar_lea.vmem %s5, %s288
        %p290 = scmp.lt.s32.totalorder %s25, 0
        %s291 = scalar_select %p290, %s25, 0
        %s292 = scalar_lea.vmem %s4, %s291
        %p293 = scmp.lt.s32.totalorder %s24, 1
        %s294 = scalar_select %p293, %s24, 1
        %p295 = scmp.lt.s32.totalorder %s25, 0
        %s296 = scalar_select %p295, %s25, 0
        %s297 = sadd.s32 %s296, %s294
        %s298 = smul.addr %s297, 4
        %s299 = scalar_lea.vmem %s5, %s298
        %p301 = scmp.eq.s32.totalorder %s25, 0
        // Predicated region
        $region49: #{transformer_block.3} parent=39 // pred_check
          %p302 = pneg %p301
        $region50: #{transformer_block.3} parent=39 // pred_check_branch
          %304 = sbr.rel (%p302) target = $region52
        $region51: #{transformer_block.3} parent=39 // pred_region
          %v305 = vld [vmem:[%s252] sm:$0xff]
          %v306 = vld [vmem:[%s1] sm:$0x1]
          %v307 = vld [vmem:[%s2] sm:$0x1]
          %vm308 = vcmask 261120
          %v309 = vsel %vm308, %v305, 0.0
          %310 = vadd.xlane.f32.xlu0 %v309
          %v311 = vpop.xlane.xlu0 %310
          %v312 = vrcp.pop 32.0
          %v313 = vmul.f32 32.0, %v312
          %v314 = vsub.f32 1.0, %v313
          %v315 = vmul.f32 %v312, %v314
          %v316 = vadd.f32 %v312, %v315
          %vm317 = vweird.f32 %v312
          %v318 = vsel %vm317, %v312, %v316
          %v319 = vmul.f32 %v311, %v318
          %v320 = vsub.f32 %v305, %v319
          %v321 = vmul.f32 %v320, %v320
          %v322 = vsel %vm308, %v321, 0.0
          %323 = vadd.xlane.f32.xlu0 %v322
          %v324 = vpop.xlane.xlu0 %323
          %v325 = vmul.f32 %v324, %v318
          %v326 = vadd.f32 %v325, 1e-05
          %v327 = vrsqrt.pop %v326
          %v328 = vmul.f32 %v327, %v326
          %v329 = vmul.f32 %v328, %v327
          %v330 = vmul.f32 0.5, %v329
          %v331 = vsub.f32 1.5, %v330
          %v332 = vmul.f32 %v327, %v331
          %vm333 = vweird.f32 %v326
          %vm334 = vweird.f32 %v327
          %vm335 = vmor %vm333, %vm334
          %v336 = vsel %vm335, %v327, %v332
          %v337 = vmul.f32 %v320, %v336
          %v339 = vperm.slane %v306, 0
          %v341 = vmul.f32 %v337, %v339
          %v343 = vperm.slane %v307, 0
          %v345 = vadd.f32 %v341, %v343
          %v346 = vpack.c.bf16 %v345, %v345
          %vm347 = vcmask 257024
          %348 = vst.msk [vmem:[#allocation2] sm:$0xf] %vm347, %v346
        $region52: #{transformer_block.3} parent=39 // pred_fallthru
          _
        %v349 = vld [vmem:[#allocation2] sm:$0xf]
        %v350 = vld [vmem:[#allocation5] sm:$0xf]
        %v351 = vld [vmem:[#allocation5 + $0x4] sm:$0xf]
        %v352 = vld [vmem:[#allocation5 + $0x8] sm:$0xf]
        %v353 = vld [vmem:[#allocation5 + $0xc] sm:$0xf]
        %v354 = vld [vmem:[%s292] sm:$0x1]
        %v356 = vperm.slane %v354, 0
        %v362 = vunpack.c.l.b16 %v350
        %v363 = vunpack.c.l.b16 %v351
        %v364 = vunpack.c.l.b16 %v352
        %v365 = vunpack.c.l.b16 %v353
        %v366 = vpack.c.b16 %v363, %v362
        %v367 = vpack.c.b16 %v365, %v364
        %vm370 = vcmask 261120
        %v372 = vsel %vm370, %v349, 0
        %374 = vmatpush.bf16.msra.mxu0 0
        %375 = vmatpush.bf16.msra.mxu0 0
        %376 = vmatpush.bf16.msra.mxu0 0
        %377 = vmatpush.bf16.msra.mxu0 0
        %378 = vmatpush.bf16.msra.mxu0 0
        %379 = vmatpush.bf16.msra.mxu0 0
        %380 = vmatpush.bf16.msra.mxu0 %v367
        %381 = vmatpush.bf16.msra.mxu0 %v366
        %382 = vmatmul.bf16.gmra.mxu0 %v372
        %v383 = vpop.f32.mrf.mxu0
        %v384 = vadd.f32 %v356, %v383
        %v385 = vpop.f32.mrf.mxu0
        %386 = vdwg.mxu0
        %v387 = vpack.c.bf16 %v384, %v384
        %vm388 = vcmask 781312
        %389 = vst.msk [vmem:[%s299] sm:$0xf] %vm388, %v387
        %p390 = scmp.lt.s32.totalorder %s24, 1
        %s391 = scalar_select %p390, %s24, 1
        %p392 = scmp.lt.s32.totalorder %s25, 0
        %s393 = scalar_select %p392, %s25, 0
        %s394 = sadd.s32 %s393, %s391
        %s395 = smul.addr %s394, 4
        %s396 = scalar_lea.vmem %s5, %s395
        // Predicated region
        $region53: #{transformer_block.3} parent=39 // pred_check
          %p397 = pneg %p172
        $region54: #{transformer_block.3} parent=39 // pred_check_branch
          %399 = sbr.rel (%p397) target = $region56
        $region55: #{transformer_block.3} parent=39 // pred_region
          _
        $region56: #{transformer_block.3} parent=39 // pred_fallthru
          _
      $region40: #{transformer_block.3} parent=5 // pred_fallthru
        _
      %p400 = scmp.le.s32.totalorder 2, %s15
      // Predicated region
      $region57: #{transformer_block.3} parent=5 // pred_check
        %p401 = pneg %p400
      $region58: #{transformer_block.3} parent=5 // pred_check_branch
        %403 = sbr.rel (%p401) target = $region60
      $region59: #{transformer_block.3} parent=5 // pred_region
        %s404 = ssub.s32 %s15, 2
        // Predicated region
        $region61: #{transformer_block.3} parent=59 // pred_check
          %p405 = pneg %p178
        $region62: #{transformer_block.3} parent=59 // pred_check_branch
          %407 = sbr.rel (%p405) target = $region64
        $region63: #{transformer_block.3} parent=59 // pred_region
          %p408 = scmp.lt.s32.totalorder %s26, 1
          %s409 = scalar_select %p408, %s26, 1
          %p410 = scmp.lt.s32.totalorder %s27, 0
          %s411 = scalar_select %p410, %s27, 0
          %s412 = sadd.s32 %s411, %s409
          %s413 = smul.addr %s412, 4
          %s414 = scalar_lea.vmem %s5, %s413
        $region64: #{transformer_block.3} parent=59 // pred_fallthru
          _
      $region60: #{transformer_block.3} parent=5 // pred_fallthru
        _
    $region6: #{transformer_block.3} parent=1 // loop_footer
      %s19 = sadd.s32 1, %s15
    $region7: #{transformer_block.3} parent=1 // loop_footer_branch
      %14 = sbr.rel target = $region3
    $region8: #{transformer_block.3} parent=1 // loop_exit
      _
    %415 = vsyncpa [#allocation4], 1
    %s416 = scalar_lea.sflag [#allocation4], 1
    %417 = vsyncpa %s416, 1
    %418 = vsyncpa [#allocation6], 1

</llo_original>
